<compile_context>
chip_gen: v7x
topology: tpu7x:2x2x1
jax: 0.10.0
libtpu: 0.0.40
codegen_flags: <defaults>
</compile_context>

<pallas_src>
import jax
import jax.numpy as jnp
from jax.experimental import pallas as pl
from jax.experimental.pallas import tpu as pltpu


# ----------------------------------------------------------------------------- kernel
def _seed_generator_kernel(
    x1t_ref,            # (1, 128, TP)  cdt : ps output (channels-first), compute dtype
    f13_ref,            # (1, 384, 1)   f32 : [feat@w1a_feat + b1a ; feat@w3a_feat + b3a]
    w1ax_ref,           # (256, 128)    cdt : mlp_1 layer-a weight, x1 part
    w1b_ref, b1b_ref,   # (128, 256) cdt, (128, 1) f32
    w3ax_ref,           # (128, 128)    cdt : mlp_3 layer-a weight, x1 part
    w3b_ref, b3b_ref,   # (128, 128) cdt, (128, 1) f32
    w4a_ref, b4a_ref,   # (64, 128)  cdt, (64, 1)  f32
    w4b_ref, b4b_ref,   # (3, 64)    cdt, (3, 1)   f32
    out_ref,            # (1, 3, TP)    f32  -- lane-dense output block
):
    cdt = w1ax_ref.dtype                        # matmul operand dtype (bf16 or f32)
    x1 = x1t_ref[0]                             # (128, TP), already compute dtype
    f13 = f13_ref[0]                            # (384, 1) f32 (biases already folded in)
    f1 = f13[:256]                              # (256, 1)
    f3 = f13[256:]                              # (128, 1)

    # mlp_1 : Conv1d(dim_feat+128, 256, 1) -> ReLU -> Conv1d(256, 128, 1)
    h = jnp.maximum(
        jnp.dot(w1ax_ref[...], x1, preferred_element_type=jnp.float32) + f1, 0.0)
    x1 = (jnp.dot(w1b_ref[...], h.astype(cdt), preferred_element_type=jnp.float32)
          + b1b_ref[...])

    # mlp_3 : Conv1d(dim_feat+128, 128, 1) -> ReLU -> Conv1d(128, 128, 1)
    h = jnp.maximum(
        jnp.dot(w3ax_ref[...], x1.astype(cdt), preferred_element_type=jnp.float32)
        + f3, 0.0)
    x3 = (jnp.dot(w3b_ref[...], h.astype(cdt), preferred_element_type=jnp.float32)
          + b3b_ref[...])

    # mlp_4 : Conv1d(128, 64, 1) -> ReLU -> Conv1d(64, 3, 1)
    h = jnp.maximum(
        jnp.dot(w4a_ref[...], x3.astype(cdt), preferred_element_type=jnp.float32)
        + b4a_ref[...], 0.0)
    out = (jnp.dot(w4b_ref[...], h.astype(cdt), preferred_element_type=jnp.float32)
           + b4b_ref[...])                      # (3, TP)

    out_ref[0] = out.astype(out_ref.dtype)


# -------------------------------------------------------------------- weight plumbing
def prepare_kernel_params(params, *, compute_dtype=jnp.bfloat16):
    """One-time weight re-layout (do at parameter-load time, not per forward call)."""
    ps_w = params["ps_w"]                       # (dim_feat, 128, num_pc)
    dim_feat, ch, num_pc = ps_w.shape           # ch == 128
    cdt = compute_dtype

    # Pad the position axis to a multiple of 128 with zero weight columns so the kernel
    # always sees lane-dense (multiple-of-128) tiles; padded columns are sliced off in
    # the wrapper.
    num_pc_pad = -(-num_pc // 128) * 128
    ps_w_pad = jnp.pad(ps_w, ((0, 0), (0, 0), (0, num_pc_pad - num_pc)))

    # Fused "preamble" GEMM, run batched over b in the wrapper (plain XLA):
    #   [ ConvTranspose ps | feat-part of mlp_1 layer a | feat-part of mlp_3 layer a ]
    wps = ps_w_pad.reshape(dim_feat, ch * num_pc_pad)      # column index = c*num_pc_pad+k
    bps = jnp.repeat(params["ps_b"], num_pc_pad)           # bias[c] for every position k
    w1af = jnp.transpose(params["m1a_w"][:, ch:, 0])       # (dim_feat, 256)
    w3af = jnp.transpose(params["m3a_w"][:, ch:, 0])       # (dim_feat, 128)
    w_pre = jnp.concatenate([wps, w1af, w3af], axis=1).astype(cdt)   # HBM-dominant: cdt
    b_pre = jnp.concatenate([bps, params["m1a_b"], params["m3a_b"]]).astype(jnp.float32)

    col = lambda v: v.reshape(-1, 1).astype(jnp.float32)   # biases stay f32 (post-acc add)
    # Conv1d(k=1) weights in channels-first matmul form are simply w[:, :, 0].
    kernel_weights = (
        params["m1a_w"][:, :ch, 0].astype(cdt),            # (256, 128)  x1-part
        params["m1b_w"][:, :, 0].astype(cdt), col(params["m1b_b"]),
        params["m3a_w"][:, :ch, 0].astype(cdt),            # (128, 128)  x1-part
        params["m3b_w"][:, :, 0].astype(cdt), col(params["m3b_b"]),
        params["m4a_w"][:, :, 0].astype(cdt), col(params["m4a_b"]),
        params["m4b_w"][:, :, 0].astype(cdt), col(params["m4b_b"]),
    )
    return dict(w_pre=w_pre, b_pre=b_pre, kernel_weights=kernel_weights,
                dim_feat=dim_feat, num_pc=num_pc, num_pc_pad=num_pc_pad,
                compute_dtype=cdt)


def _padded_vmem_bytes(shape, dtype):
    """Approximate VMEM footprint of one buffer of `shape` (lane/sublane padded)."""
    itemsize = jnp.dtype(dtype).itemsize
    dims = list(shape)
    dims[-1] = -(-dims[-1] // 128) * 128
    if len(dims) >= 2:
        sub = max(1, (8 * 4) // itemsize)                  # 8 (f32) / 16 (bf16) sublanes
        dims[-2] = -(-dims[-2] // sub) * sub
    n = 1
    for d in dims:
        n *= d
    return n * itemsize


def _pick_tp(num_pc_pad, b):
    """Position tile: largest multiple of 128 <= 512 dividing num_pc_pad; when b == 1
    prefer >= 2 position tiles so both v7x TensorCores get work."""
    candidates = [t for t in range(128, min(num_pc_pad, 512) + 1, 128)
                  if num_pc_pad % t == 0]
    tp = max(candidates)
    if b == 1 and num_pc_pad // tp < 2:
        split = [t for t in candidates if num_pc_pad // t >= 2]
        if split:
            tp = max(split)
    return tp


# -------------------------------------------------------------------------- forward
def seed_generator_forward(feat, kparams):
    """feat: (b, dim_feat, 1) float32 (PyTorch NCW). Returns (b, 3, num_pc) (NCW)."""
    b = feat.shape[0]
    num_pc = kparams["num_pc"]
    num_pc_pad = kparams["num_pc_pad"]
    cdt = kparams["compute_dtype"]
    f2d = feat[:, :, 0]                                    # (b, dim_feat)

    # Hoisted + fused preamble GEMM (ps ConvTranspose and the feat-only halves of the
    # first conv of mlp_1 / mlp_3), batched over b.  bf16 operands / f32 accumulation on
    # the performance path; "highest" only when validating in f32.
    prec = "highest" if cdt == jnp.float32 else None
    pre = (jnp.dot(f2d.astype(cdt), kparams["w_pre"],
                   preferred_element_type=jnp.float32, precision=prec)
           + kparams["b_pre"])                             # (b, 128*num_pc_pad + 384) f32
    n_ps = 128 * num_pc_pad
    x1t = pre[:, :n_ps].reshape(b, 128, num_pc_pad).astype(cdt)   # NCW ps output, cdt
    f13t = pre[:, n_ps:].reshape(b, 384, 1)                       # f32 (tiny)

    weights = kparams["kernel_weights"]

    tp = _pick_tp(num_pc_pad, b)
    grid = (b, num_pc_pad // tp)

    in_specs = [
        pl.BlockSpec((1, 128, tp), lambda i, j: (i, 0, j)),
        pl.BlockSpec((1, 384, 1), lambda i, j: (i, 0, 0)),
    ] + [pl.BlockSpec(w.shape, lambda i, j: (0, 0)) for w in weights]
    out_specs = pl.BlockSpec((1, 3, tp), lambda i, j: (i, 0, j))

    # Explicit VMEM budget derived from the actual (double-buffered) blocks plus
    # headroom for the in-kernel f32 intermediates (<= ~1.5 MiB at tp=512).
    blocks = ([((1, 128, tp), cdt), ((1, 384, 1), jnp.float32),
               ((1, 3, tp), jnp.float32)]
              + [(w.shape, w.dtype) for w in weights])
    resident = sum(_padded_vmem_bytes(s, d) for s, d in blocks)
    vmem_limit = int(min(2 * resident + (8 << 20), 64 << 20))

    flops = 2 * b * num_pc_pad * (256 * 128 + 128 * 256 + 128 * 128
                                  + 128 * 128 + 64 * 128 + 3 * 64)
    bytes_accessed = int(sum(int(a.size) * a.dtype.itemsize
                             for a in (x1t, f13t, *weights))
                         + b * 3 * num_pc_pad * 4)

    out = pl.pallas_call(
        _seed_generator_kernel,
        out_shape=jax.ShapeDtypeStruct((b, 3, num_pc_pad), jnp.float32),
        grid=grid,
        in_specs=in_specs,
        out_specs=out_specs,
        compiler_params=pltpu.CompilerParams(
            dimension_semantics=("parallel", "parallel"),
            vmem_limit_bytes=vmem_limit),
        cost_estimate=pl.CostEstimate(
            flops=flops, transcendentals=0, bytes_accessed=bytes_accessed),
    )(x1t, f13t, *weights)

    if num_pc_pad != num_pc:
        out = out[:, :, :num_pc]
    return out                                             # NCW: (b, 3, num_pc)


# ------------------------------------------------------------------ params & reference
def init_params(key, dim_feat, num_pc):
    ks = jax.random.split(key, 14)
    s = 0.05
    n = lambda k, shape: jax.random.normal(k, shape, jnp.float32) * s
    return {
        # nn.ConvTranspose1d(dim_feat, 128, num_pc)
        "ps_w": n(ks[0], (dim_feat, 128, num_pc)), "ps_b": n(ks[1], (128,)),
        # mlp_1 = Conv1d(dim_feat+128, 256, 1) -> ReLU -> Conv1d(256, 128, 1)
        "m1a_w": n(ks[2], (256, dim_feat + 128, 1)), "m1a_b": n(ks[3], (256,)),
        "m1b_w": n(ks[4], (128, 256, 1)), "m1b_b": n(ks[5], (128,)),
        # mlp_3 = Conv1d(dim_feat+128, 128, 1) -> ReLU -> Conv1d(128, 128, 1)
        "m3a_w": n(ks[6], (128, dim_feat + 128, 1)), "m3a_b": n(ks[7], (128,)),
        "m3b_w": n(ks[8], (128, 128, 1)), "m3b_b": n(ks[9], (128,)),
        # mlp_4 = Conv1d(128, 64, 1) -> ReLU -> Conv1d(64, 3, 1)
        "m4a_w": n(ks[10], (64, 128, 1)), "m4a_b": n(ks[11], (64,)),
        "m4b_w": n(ks[12], (3, 64, 1)), "m4b_b": n(ks[13], (3,)),
    }


def reference_forward(feat, p):
    """Pure-JAX mirror of the PyTorch SeedGenerator.forward (NCW), for validation."""
    b, dim_feat, _ = feat.shape
    f = feat[:, :, 0]
    x1 = (jnp.einsum("bd,dck->bck", f, p["ps_w"], precision="highest")
          + p["ps_b"][None, :, None])

    def conv1x1(x, w, bias):
        return (jnp.einsum("bcl,oc->bol", x, w[:, :, 0], precision="highest")
                + bias[None, :, None])

    frep = jnp.broadcast_to(f[:, :, None], (b, dim_feat, x1.shape[-1]))
    h = jax.nn.relu(conv1x1(jnp.concatenate([x1, frep], axis=1), p["m1a_w"], p["m1a_b"]))
    x1 = conv1x1(h, p["m1b_w"], p["m1b_b"])
    h = jax.nn.relu(conv1x1(jnp.concatenate([x1, frep], axis=1), p["m3a_w"], p["m3a_b"]))
    x3 = conv1x1(h, p["m3b_w"], p["m3b_b"])
    h = jax.nn.relu(conv1x1(x3, p["m4a_w"], p["m4a_b"]))
    return conv1x1(h, p["m4b_w"], p["m4b_b"])


# ------------------------------------------------------------------------------- main
def _check_config(key, b, dim_feat, num_pc):
    kparam_key, kfeat_key = jax.random.split(key)
    params = init_params(kparam_key, dim_feat, num_pc)
    feat = jax.random.normal(kfeat_key, (b, dim_feat, 1), jnp.float32)
    ref = reference_forward(feat, params)

    # f32-operand path: tight absolute tolerance catches layout / indexing regressions.
    kp32 = prepare_kernel_params(params, compute_dtype=jnp.float32)
    out32 = jax.block_until_ready(seed_generator_forward(feat, kp32))
    assert out32.shape == (b, 3, num_pc), out32.shape
    err32 = float(jnp.max(jnp.abs(out32 - ref)))
    if not err32 < 2e-3:
        raise AssertionError(f"f32 kernel/reference mismatch, max abs err = {err32}")

    # bf16-operand path (f32 accumulation) — the performance configuration.
    # Use a relative check so compounding bf16 error is judged against signal scale.
    kp16 = prepare_kernel_params(params, compute_dtype=jnp.bfloat16)
    out16 = jax.block_until_ready(seed_generator_forward(feat, kp16))
    assert out16.shape == (b, 3, num_pc), out16.shape
    err16 = float(jnp.max(jnp.abs(out16 - ref)))
    scale = float(jnp.max(jnp.abs(ref))) + 1e-6
    if not err16 < 5e-2 * scale + 1e-3:
        raise AssertionError(
            f"bf16 kernel/reference mismatch, max abs err = {err16}, ref scale = {scale}")


if __name__ == "__main__":
    key = jax.random.PRNGKey(0)
    k1, k2 = jax.random.split(key)
    # Small shapes (module defaults are dim_feat=512, num_pc=64):
    #  (1) sub-128 num_pc exercises the lane-padding path,
    #  (2) b=1 with num_pc_pad >= 256 exercises the >=2-position-tile split (v7x).
    _check_config(k1, b=2, dim_feat=64, num_pc=16)
    _check_config(k2, b=1, dim_feat=32, num_pc=256)
    print("KERNEL_OK")
</pallas_src>

<mosaic_0001>
module attributes {stable_mosaic.version = 11 : i64} {
  func.func @_seed_generator_kernel(%arg0: i32, %arg1: i32, %arg2: memref<1x128x128xf32, #tpu.memory_space<vmem>>, %arg3: memref<1x384x1xf32, #tpu.memory_space<vmem>>, %arg4: memref<256x128xf32, #tpu.memory_space<vmem>>, %arg5: memref<128x256xf32, #tpu.memory_space<vmem>>, %arg6: memref<128x1xf32, #tpu.memory_space<vmem>>, %arg7: memref<128x128xf32, #tpu.memory_space<vmem>>, %arg8: memref<128x128xf32, #tpu.memory_space<vmem>>, %arg9: memref<128x1xf32, #tpu.memory_space<vmem>>, %arg10: memref<64x128xf32, #tpu.memory_space<vmem>>, %arg11: memref<64x1xf32, #tpu.memory_space<vmem>>, %arg12: memref<3x64xf32, #tpu.memory_space<vmem>>, %arg13: memref<3x1xf32, #tpu.memory_space<vmem>>, %arg14: memref<1x3x128xf32, #tpu.memory_space<vmem>>) attributes {dimension_semantics = [#tpu.dimension_semantics<parallel>, #tpu.dimension_semantics<parallel>], iteration_bounds = array<i64: 2, 1>, scalar_prefetch = 0 : i64, scratch_operands = 0 : i64, tpu.core_type = #tpu.core_type<tc>, window_params = [{transform_indices = @transform_0, window_bounds = array<i64: 1, 128, 128>}, {transform_indices = @transform_1, window_bounds = array<i64: 1, 384, 1>}, {pipeline_mode = #tpu.pipeline_mode<synchronous>, transform_indices = @transform_2, window_bounds = array<i64: 256, 128>}, {pipeline_mode = #tpu.pipeline_mode<synchronous>, transform_indices = @transform_3, window_bounds = array<i64: 128, 256>}, {pipeline_mode = #tpu.pipeline_mode<synchronous>, transform_indices = @transform_4, window_bounds = array<i64: 128, 1>}, {pipeline_mode = #tpu.pipeline_mode<synchronous>, transform_indices = @transform_5, window_bounds = array<i64: 128, 128>}, {pipeline_mode = #tpu.pipeline_mode<synchronous>, transform_indices = @transform_6, window_bounds = array<i64: 128, 128>}, {pipeline_mode = #tpu.pipeline_mode<synchronous>, transform_indices = @transform_7, window_bounds = array<i64: 128, 1>}, {pipeline_mode = #tpu.pipeline_mode<synchronous>, transform_indices = @transform_8, window_bounds = array<i64: 64, 128>}, {pipeline_mode = #tpu.pipeline_mode<synchronous>, transform_indices = @transform_9, window_bounds = array<i64: 64, 1>}, {pipeline_mode = #tpu.pipeline_mode<synchronous>, transform_indices = @transform_10, window_bounds = array<i64: 3, 64>}, {pipeline_mode = #tpu.pipeline_mode<synchronous>, transform_indices = @transform_11, window_bounds = array<i64: 3, 1>}, {transform_indices = @transform_12, window_bounds = array<i64: 1, 3, 128>}]} {
    %c0 = arith.constant 0 : index
    %c0_0 = arith.constant 0 : index
    %c0_1 = arith.constant 0 : index
    %0 = vector.load %arg2[%c0, %c0_0, %c0_1] : memref<1x128x128xf32, #tpu.memory_space<vmem>>, vector<1x128x128xf32>
    %1 = vector.shape_cast %0 : vector<1x128x128xf32> to vector<128x128xf32>
    %c0_2 = arith.constant 0 : index
    %c0_3 = arith.constant 0 : index
    %c0_4 = arith.constant 0 : index
    %2 = vector.load %arg3[%c0_2, %c0_3, %c0_4] : memref<1x384x1xf32, #tpu.memory_space<vmem>>, vector<1x384x1xf32>
    %3 = vector.shape_cast %2 : vector<1x384x1xf32> to vector<384x1xf32>
    %4 = vector.extract_strided_slice %3 {offsets = [0, 0], sizes = [256, 1], strides = [1, 1]} : vector<384x1xf32> to vector<256x1xf32>
    %5 = vector.extract_strided_slice %3 {offsets = [256, 0], sizes = [128, 1], strides = [1, 1]} : vector<384x1xf32> to vector<128x1xf32>
    %c0_5 = arith.constant 0 : index
    %c0_6 = arith.constant 0 : index
    %6 = vector.load %arg4[%c0_5, %c0_6] : memref<256x128xf32, #tpu.memory_space<vmem>>, vector<256x128xf32>
    %cst = arith.constant dense<0.000000e+00> : vector<256x128xf32>
    %7 = tpu.matmul %6, %1, %cst {dimension_numbers = #tpu.dot_dimension_numbers<[1], [0], [0], [1], [0, 0, 1, 1], [], []>} : vector<256x128xf32>, vector<128x128xf32>, vector<256x128xf32> -> vector<256x128xf32>
    %8 = vector.broadcast %4 : vector<256x1xf32> to vector<256x128xf32>
    %9 = arith.addf %7, %8 : vector<256x128xf32>
    %cst_7 = arith.constant 0.000000e+00 : f32
    %10 = vector.broadcast %cst_7 : f32 to vector<256x128xf32>
    %11 = arith.maximumf %9, %10 : vector<256x128xf32>
    %c0_8 = arith.constant 0 : index
    %c0_9 = arith.constant 0 : index
    %12 = vector.load %arg5[%c0_8, %c0_9] : memref<128x256xf32, #tpu.memory_space<vmem>>, vector<128x256xf32>
    %cst_10 = arith.constant dense<0.000000e+00> : vector<128x128xf32>
    %13 = tpu.matmul %12, %11, %cst_10 {dimension_numbers = #tpu.dot_dimension_numbers<[1], [0], [0], [1], [0, 0, 1, 1], [], []>} : vector<128x256xf32>, vector<256x128xf32>, vector<128x128xf32> -> vector<128x128xf32>
    %c0_11 = arith.constant 0 : index
    %c0_12 = arith.constant 0 : index
    %14 = vector.load %arg6[%c0_11, %c0_12] : memref<128x1xf32, #tpu.memory_space<vmem>>, vector<128x1xf32>
    %15 = vector.broadcast %14 : vector<128x1xf32> to vector<128x128xf32>
    %16 = arith.addf %13, %15 : vector<128x128xf32>
    %c0_13 = arith.constant 0 : index
    %c0_14 = arith.constant 0 : index
    %17 = vector.load %arg7[%c0_13, %c0_14] : memref<128x128xf32, #tpu.memory_space<vmem>>, vector<128x128xf32>
    %cst_15 = arith.constant dense<0.000000e+00> : vector<128x128xf32>
    %18 = tpu.matmul %17, %16, %cst_15 {dimension_numbers = #tpu.dot_dimension_numbers<[1], [0], [0], [1], [0, 0, 1, 1], [], []>} : vector<128x128xf32>, vector<128x128xf32>, vector<128x128xf32> -> vector<128x128xf32>
    %19 = vector.broadcast %5 : vector<128x1xf32> to vector<128x128xf32>
    %20 = arith.addf %18, %19 : vector<128x128xf32>
    %cst_16 = arith.constant 0.000000e+00 : f32
    %21 = vector.broadcast %cst_16 : f32 to vector<128x128xf32>
    %22 = arith.maximumf %20, %21 : vector<128x128xf32>
    %c0_17 = arith.constant 0 : index
    %c0_18 = arith.constant 0 : index
    %23 = vector.load %arg8[%c0_17, %c0_18] : memref<128x128xf32, #tpu.memory_space<vmem>>, vector<128x128xf32>
    %cst_19 = arith.constant dense<0.000000e+00> : vector<128x128xf32>
    %24 = tpu.matmul %23, %22, %cst_19 {dimension_numbers = #tpu.dot_dimension_numbers<[1], [0], [0], [1], [0, 0, 1, 1], [], []>} : vector<128x128xf32>, vector<128x128xf32>, vector<128x128xf32> -> vector<128x128xf32>
    %c0_20 = arith.constant 0 : index
    %c0_21 = arith.constant 0 : index
    %25 = vector.load %arg9[%c0_20, %c0_21] : memref<128x1xf32, #tpu.memory_space<vmem>>, vector<128x1xf32>
    %26 = vector.broadcast %25 : vector<128x1xf32> to vector<128x128xf32>
    %27 = arith.addf %24, %26 : vector<128x128xf32>
    %c0_22 = arith.constant 0 : index
    %c0_23 = arith.constant 0 : index
    %28 = vector.load %arg10[%c0_22, %c0_23] : memref<64x128xf32, #tpu.memory_space<vmem>>, vector<64x128xf32>
    %cst_24 = arith.constant dense<0.000000e+00> : vector<64x128xf32>
    %29 = tpu.matmul %28, %27, %cst_24 {dimension_numbers = #tpu.dot_dimension_numbers<[1], [0], [0], [1], [0, 0, 1, 1], [], []>} : vector<64x128xf32>, vector<128x128xf32>, vector<64x128xf32> -> vector<64x128xf32>
    %c0_25 = arith.constant 0 : index
    %c0_26 = arith.constant 0 : index
    %30 = vector.load %arg11[%c0_25, %c0_26] : memref<64x1xf32, #tpu.memory_space<vmem>>, vector<64x1xf32>
    %31 = vector.broadcast %30 : vector<64x1xf32> to vector<64x128xf32>
    %32 = arith.addf %29, %31 : vector<64x128xf32>
    %cst_27 = arith.constant 0.000000e+00 : f32
    %33 = vector.broadcast %cst_27 : f32 to vector<64x128xf32>
    %34 = arith.maximumf %32, %33 : vector<64x128xf32>
    %c0_28 = arith.constant 0 : index
    %c0_29 = arith.constant 0 : index
    %35 = vector.load %arg12[%c0_28, %c0_29] : memref<3x64xf32, #tpu.memory_space<vmem>>, vector<3x64xf32>
    %cst_30 = arith.constant dense<0.000000e+00> : vector<3x128xf32>
    %36 = tpu.matmul %35, %34, %cst_30 {dimension_numbers = #tpu.dot_dimension_numbers<[1], [0], [0], [1], [0, 0, 1, 1], [], []>} : vector<3x64xf32>, vector<64x128xf32>, vector<3x128xf32> -> vector<3x128xf32>
    %c0_31 = arith.constant 0 : index
    %c0_32 = arith.constant 0 : index
    %37 = vector.load %arg13[%c0_31, %c0_32] : memref<3x1xf32, #tpu.memory_space<vmem>>, vector<3x1xf32>
    %38 = vector.broadcast %37 : vector<3x1xf32> to vector<3x128xf32>
    %39 = arith.addf %36, %38 : vector<3x128xf32>
    %c0_33 = arith.constant 0 : index
    %c0_34 = arith.constant 0 : index
    %c0_35 = arith.constant 0 : index
    %40 = vector.load %arg14[%c0_33, %c0_34, %c0_35] : memref<1x3x128xf32, #tpu.memory_space<vmem>>, vector<1x3x128xf32>
    %41 = vector.shape_cast %40 : vector<1x3x128xf32> to vector<3x128xf32>
    %42 = vector.shape_cast %39 : vector<3x128xf32> to vector<1x3x128xf32>
    tpu.vector_store %arg14[%c0_33, %c0_34, %c0_35], %42 {strides = array<i32>} : memref<1x3x128xf32, #tpu.memory_space<vmem>>, vector<1x3x128xf32>,
    return
  }
  func.func @transform_0(%arg0: i32, %arg1: i32) -> (i32, i32, i32) {
    %c0_i32 = arith.constant 0 : i32
    %c0_i32_0 = arith.constant 0 : i32
    return %arg0, %c0_i32, %arg1 : i32, i32, i32
  }
  func.func @transform_1(%arg0: i32, %arg1: i32) -> (i32, i32, i32) {
    %c0_i32 = arith.constant 0 : i32
    %c0_i32_0 = arith.constant 0 : i32
    %c0_i32_1 = arith.constant 0 : i32
    return %arg0, %c0_i32, %c0_i32_0 : i32, i32, i32
  }
  func.func @transform_2(%arg0: i32, %arg1: i32) -> (i32, i32) {
    %c0_i32 = arith.constant 0 : i32
    %c0_i32_0 = arith.constant 0 : i32
    %c0_i32_1 = arith.constant 0 : i32
    return %c0_i32, %c0_i32_0 : i32, i32
  }
  func.func @transform_3(%arg0: i32, %arg1: i32) -> (i32, i32) {
    %c0_i32 = arith.constant 0 : i32
    %c0_i32_0 = arith.constant 0 : i32
    %c0_i32_1 = arith.constant 0 : i32
    return %c0_i32, %c0_i32_0 : i32, i32
  }
  func.func @transform_4(%arg0: i32, %arg1: i32) -> (i32, i32) {
    %c0_i32 = arith.constant 0 : i32
    %c0_i32_0 = arith.constant 0 : i32
    %c0_i32_1 = arith.constant 0 : i32
    return %c0_i32, %c0_i32_0 : i32, i32
  }
  func.func @transform_5(%arg0: i32, %arg1: i32) -> (i32, i32) {
    %c0_i32 = arith.constant 0 : i32
    %c0_i32_0 = arith.constant 0 : i32
    %c0_i32_1 = arith.constant 0 : i32
    return %c0_i32, %c0_i32_0 : i32, i32
  }
  func.func @transform_6(%arg0: i32, %arg1: i32) -> (i32, i32) {
    %c0_i32 = arith.constant 0 : i32
    %c0_i32_0 = arith.constant 0 : i32
    %c0_i32_1 = arith.constant 0 : i32
    return %c0_i32, %c0_i32_0 : i32, i32
  }
  func.func @transform_7(%arg0: i32, %arg1: i32) -> (i32, i32) {
    %c0_i32 = arith.constant 0 : i32
    %c0_i32_0 = arith.constant 0 : i32
    %c0_i32_1 = arith.constant 0 : i32
    return %c0_i32, %c0_i32_0 : i32, i32
  }
  func.func @transform_8(%arg0: i32, %arg1: i32) -> (i32, i32) {
    %c0_i32 = arith.constant 0 : i32
    %c0_i32_0 = arith.constant 0 : i32
    %c0_i32_1 = arith.constant 0 : i32
    return %c0_i32, %c0_i32_0 : i32, i32
  }
  func.func @transform_9(%arg0: i32, %arg1: i32) -> (i32, i32) {
    %c0_i32 = arith.constant 0 : i32
    %c0_i32_0 = arith.constant 0 : i32
    %c0_i32_1 = arith.constant 0 : i32
    return %c0_i32, %c0_i32_0 : i32, i32
  }
  func.func @transform_10(%arg0: i32, %arg1: i32) -> (i32, i32) {
    %c0_i32 = arith.constant 0 : i32
    %c0_i32_0 = arith.constant 0 : i32
    %c0_i32_1 = arith.constant 0 : i32
    return %c0_i32, %c0_i32_0 : i32, i32
  }
  func.func @transform_11(%arg0: i32, %arg1: i32) -> (i32, i32) {
    %c0_i32 = arith.constant 0 : i32
    %c0_i32_0 = arith.constant 0 : i32
    %c0_i32_1 = arith.constant 0 : i32
    return %c0_i32, %c0_i32_0 : i32, i32
  }
  func.func @transform_12(%arg0: i32, %arg1: i32) -> (i32, i32, i32) {
    %c0_i32 = arith.constant 0 : i32
    %c0_i32_0 = arith.constant 0 : i32
    return %arg0, %c0_i32, %arg1 : i32, i32, i32
  }
}

</mosaic_0001>

<llo_original>
// kernel: tpu_custom_call.1
$region0: #{tpu_custom_call.1}
  #allocation0 [shape = 'u32[]', space=smem, size = 0x4, offset = 0x4, fixed_abs, tag = 'smem constant byte address 0x4 - core index']
  #allocation1 [shape = 'u32[144,128]{1,0:T(1,128)}', space=vmem, size = 0x12000, scoped, tag = 'internal scratch']
  %s0 = inlined_call_operand.vmem [shape: f32[2,128,128], index: 0, kind: input, shape index: {}]
  %s1 = inlined_call_operand.vmem [shape: f32[2,384,1], index: 1, kind: input, shape index: {}]
  %s2 = inlined_call_operand.vmem [shape: f32[256,128], index: 2, kind: input, shape index: {}]
  %s3 = inlined_call_operand.vmem [shape: f32[128,256], index: 3, kind: input, shape index: {}]
  %s4 = inlined_call_operand.vmem [shape: f32[128,1], index: 4, kind: input, shape index: {}]
  %s5 = inlined_call_operand.vmem [shape: f32[128,128], index: 5, kind: input, shape index: {}]
  %s6 = inlined_call_operand.vmem [shape: f32[128,128], index: 6, kind: input, shape index: {}]
  %s7 = inlined_call_operand.vmem [shape: f32[128,1], index: 7, kind: input, shape index: {}]
  %s8 = inlined_call_operand.vmem [shape: f32[64,128], index: 8, kind: input, shape index: {}]
  %s9 = inlined_call_operand.vmem [shape: f32[64,1], index: 9, kind: input, shape index: {}]
  %s10 = inlined_call_operand.vmem [shape: f32[3,64], index: 10, kind: input, shape index: {}]
  %s11 = inlined_call_operand.vmem [shape: f32[3,1], index: 11, kind: input, shape index: {}]
  %s12 = inlined_call_operand.vmem [shape: f32[2,3,128], index: 12, kind: output, shape index: {}]
  %s13 = sld [smem:[#allocation0]]
  $region81: #{tpu_custom_call.1} parent=0
    _
  %s15 = ssub.s32 1, %s13
  %s16 = scalar_select 0, %s15, %s13
  loop: start=0, step=1, limit=4
  $region2: #{tpu_custom_call.1} parent=0 // loop_pre_header
    _
  $region3: #{tpu_custom_call.1} parent=0 // loop_header
    %s18 = sphi 0, %s22
    %p19 = scmp.ge.s32.totalorder %s18, 4
    %s25 = sphi 0, %s37
    %s26 = sphi 0, %s33
    %s27 = sphi 0, %s25
    %s28 = sphi 0, %s26
    %s29 = sphi 0, %s27
    %s30 = sphi 0, %s28
    %s42 = sphi 0, %s44
    %s45 = sphi 0, %s42
    %s46 = sphi 0, %s45
    %s62 = sphi 0, %s46
    %s68 = sphi 0, %s70
    %s71 = sphi 0, %s68
    %s72 = sphi 0, %s71
    %s88 = sphi 0, %s72
    %s92 = sphi 0, %s92
    %s94 = sphi 0, %s92
    %s95 = sphi 0, %s94
    %s109 = sphi 0, %s95
    %s113 = sphi 0, %s113
    %s115 = sphi 0, %s113
    %s116 = sphi 0, %s115
    %s130 = sphi 0, %s116
    %s134 = sphi 0, %s134
    %s136 = sphi 0, %s134
    %s137 = sphi 0, %s136
    %s151 = sphi 0, %s137
    %s155 = sphi 0, %s155
    %s157 = sphi 0, %s155
    %s158 = sphi 0, %s157
    %s172 = sphi 0, %s158
    %s176 = sphi 0, %s176
    %s178 = sphi 0, %s176
    %s179 = sphi 0, %s178
    %s193 = sphi 0, %s179
    %s197 = sphi 0, %s197
    %s199 = sphi 0, %s197
    %s200 = sphi 0, %s199
    %s214 = sphi 0, %s200
    %s218 = sphi 0, %s218
    %s220 = sphi 0, %s218
    %s221 = sphi 0, %s220
    %s235 = sphi 0, %s221
    %s239 = sphi 0, %s239
    %s241 = sphi 0, %s239
    %s242 = sphi 0, %s241
    %s256 = sphi 0, %s242
    %s260 = sphi 0, %s260
    %s262 = sphi 0, %s260
    %s263 = sphi 0, %s262
    %s277 = sphi 0, %s263
    %s281 = sphi 0, %s281
    %s283 = sphi 0, %s281
    %s284 = sphi 0, %s283
    %s298 = sphi 0, %s284
    %s306 = sphi 0, %s308
    %s309 = sphi 0, %s306
    %s310 = sphi 0, %s309
    %s326 = sphi 0, %s310
  $region4: #{tpu_custom_call.1} parent=0 // loop_header_branch
    %21 = sbr.rel (%p19) target = $region8
  $region5: #{tpu_custom_call.1} parent=0 // loop_body
    %s23 = ssub.s32 %s18, 1
    %s24 = ssub.s32 %s18, 2
    %s31 = sadd.s32 1, %s26
    %p32 = scmp.ge.s32.totalorder %s31, 1
    %s33 = scalar_select %p32, 0, %s31
    %s34 = sadd.s32 1, %s25
    %s35 = scalar_select %p32, %s34, %s25
    %p36 = scmp.ge.s32.totalorder %s35, 2
    %s37 = scalar_select %p36, 0, %s35
    %s38 = ssub.s32 %s25, %s37
    %s39 = ssub.s32 %s26, %s33
    %s40 = sor.u32 %s38, %s39
    %p41 = scmp.eq.s32.totalorder %s40, 0
    %s43 = sadd.s32 %s42, 1
    %s44 = scalar_select %p41, %s42, %s43
    %p47 = pneg %p41
    %p48 = scmp.eq.s32.totalorder %s18, 1
    %p49 = por %p47, %p48
    %p50 = scmp.ne.s32.totalorder %s42, %s45
    %p51 = scmp.eq.s32.totalorder %s18, 0
    %p52 = por %p50, %p51
    %p53 = scmp.ne.s32.totalorder %s42, %s45
    %p54 = scmp.eq.s32.totalorder %s23, 1
    %p55 = por %p53, %p54
    %p56 = scmp.ne.s32.totalorder %s45, %s46
    %p57 = scmp.eq.s32.totalorder %s23, 0
    %p58 = por %p56, %p57
    %p59 = scmp.ne.s32.totalorder %s45, %s46
    %p60 = scmp.eq.s32.totalorder %s24, 1
    %p61 = por %p59, %p60
    %p63 = scmp.ne.s32.totalorder %s46, %s62
    %p64 = scmp.eq.s32.totalorder %s24, 0
    %p65 = por %p63, %p64
    %s66 = ssub.s32 %s25, %s37
    %p67 = scmp.eq.s32.totalorder %s66, 0
    %s69 = sadd.s32 %s68, 1
    %s70 = scalar_select %p67, %s68, %s69
    %p73 = pneg %p67
    %p74 = scmp.eq.s32.totalorder %s18, 1
    %p75 = por %p73, %p74
    %p76 = scmp.ne.s32.totalorder %s68, %s71
    %p77 = scmp.eq.s32.totalorder %s18, 0
    %p78 = por %p76, %p77
    %p79 = scmp.ne.s32.totalorder %s68, %s71
    %p80 = scmp.eq.s32.totalorder %s23, 1
    %p81 = por %p79, %p80
    %p82 = scmp.ne.s32.totalorder %s71, %s72
    %p83 = scmp.eq.s32.totalorder %s23, 0
    %p84 = por %p82, %p83
    %p85 = scmp.ne.s32.totalorder %s71, %s72
    %p86 = scmp.eq.s32.totalorder %s24, 1
    %p87 = por %p85, %p86
    %p89 = scmp.ne.s32.totalorder %s72, %s88
    %p90 = scmp.eq.s32.totalorder %s24, 0
    %p91 = por %p89, %p90
    %s93 = sadd.s32 %s92, 1
    %p96 = scmp.eq.s32.totalorder %s18, 1
    %p97 = scmp.ne.s32.totalorder %s92, %s94
    %p98 = scmp.eq.s32.totalorder %s18, 0
    %p99 = por %p97, %p98
    %p100 = scmp.ne.s32.totalorder %s92, %s94
    %p101 = scmp.eq.s32.totalorder %s23, 1
    %p102 = por %p100, %p101
    %p103 = scmp.ne.s32.totalorder %s94, %s95
    %p104 = scmp.eq.s32.totalorder %s23, 0
    %p105 = por %p103, %p104
    %p106 = scmp.ne.s32.totalorder %s94, %s95
    %p107 = scmp.eq.s32.totalorder %s24, 1
    %p108 = por %p106, %p107
    %p110 = scmp.ne.s32.totalorder %s95, %s109
    %p111 = scmp.eq.s32.totalorder %s24, 0
    %p112 = por %p110, %p111
    %s114 = sadd.s32 %s113, 1
    %p117 = scmp.eq.s32.totalorder %s18, 1
    %p118 = scmp.ne.s32.totalorder %s113, %s115
    %p119 = scmp.eq.s32.totalorder %s18, 0
    %p120 = por %p118, %p119
    %p121 = scmp.ne.s32.totalorder %s113, %s115
    %p122 = scmp.eq.s32.totalorder %s23, 1
    %p123 = por %p121, %p122
    %p124 = scmp.ne.s32.totalorder %s115, %s116
    %p125 = scmp.eq.s32.totalorder %s23, 0
    %p126 = por %p124, %p125
    %p127 = scmp.ne.s32.totalorder %s115, %s116
    %p128 = scmp.eq.s32.totalorder %s24, 1
    %p129 = por %p127, %p128
    %p131 = scmp.ne.s32.totalorder %s116, %s130
    %p132 = scmp.eq.s32.totalorder %s24, 0
    %p133 = por %p131, %p132
    %s135 = sadd.s32 %s134, 1
    %p138 = scmp.eq.s32.totalorder %s18, 1
    %p139 = scmp.ne.s32.totalorder %s134, %s136
    %p140 = scmp.eq.s32.totalorder %s18, 0
    %p141 = por %p139, %p140
    %p142 = scmp.ne.s32.totalorder %s134, %s136
    %p143 = scmp.eq.s32.totalorder %s23, 1
    %p144 = por %p142, %p143
    %p145 = scmp.ne.s32.totalorder %s136, %s137
    %p146 = scmp.eq.s32.totalorder %s23, 0
    %p147 = por %p145, %p146
    %p148 = scmp.ne.s32.totalorder %s136, %s137
    %p149 = scmp.eq.s32.totalorder %s24, 1
    %p150 = por %p148, %p149
    %p152 = scmp.ne.s32.totalorder %s137, %s151
    %p153 = scmp.eq.s32.totalorder %s24, 0
    %p154 = por %p152, %p153
    %s156 = sadd.s32 %s155, 1
    %p159 = scmp.eq.s32.totalorder %s18, 1
    %p160 = scmp.ne.s32.totalorder %s155, %s157
    %p161 = scmp.eq.s32.totalorder %s18, 0
    %p162 = por %p160, %p161
    %p163 = scmp.ne.s32.totalorder %s155, %s157
    %p164 = scmp.eq.s32.totalorder %s23, 1
    %p165 = por %p163, %p164
    %p166 = scmp.ne.s32.totalorder %s157, %s158
    %p167 = scmp.eq.s32.totalorder %s23, 0
    %p168 = por %p166, %p167
    %p169 = scmp.ne.s32.totalorder %s157, %s158
    %p170 = scmp.eq.s32.totalorder %s24, 1
    %p171 = por %p169, %p170
    %p173 = scmp.ne.s32.totalorder %s158, %s172
    %p174 = scmp.eq.s32.totalorder %s24, 0
    %p175 = por %p173, %p174
    %s177 = sadd.s32 %s176, 1
    %p180 = scmp.eq.s32.totalorder %s18, 1
    %p181 = scmp.ne.s32.totalorder %s176, %s178
    %p182 = scmp.eq.s32.totalorder %s18, 0
    %p183 = por %p181, %p182
    %p184 = scmp.ne.s32.totalorder %s176, %s178
    %p185 = scmp.eq.s32.totalorder %s23, 1
    %p186 = por %p184, %p185
    %p187 = scmp.ne.s32.totalorder %s178, %s179
    %p188 = scmp.eq.s32.totalorder %s23, 0
    %p189 = por %p187, %p188
    %p190 = scmp.ne.s32.totalorder %s178, %s179
    %p191 = scmp.eq.s32.totalorder %s24, 1
    %p192 = por %p190, %p191
    %p194 = scmp.ne.s32.totalorder %s179, %s193
    %p195 = scmp.eq.s32.totalorder %s24, 0
    %p196 = por %p194, %p195
    %s198 = sadd.s32 %s197, 1
    %p201 = scmp.eq.s32.totalorder %s18, 1
    %p202 = scmp.ne.s32.totalorder %s197, %s199
    %p203 = scmp.eq.s32.totalorder %s18, 0
    %p204 = por %p202, %p203
    %p205 = scmp.ne.s32.totalorder %s197, %s199
    %p206 = scmp.eq.s32.totalorder %s23, 1
    %p207 = por %p205, %p206
    %p208 = scmp.ne.s32.totalorder %s199, %s200
    %p209 = scmp.eq.s32.totalorder %s23, 0
    %p210 = por %p208, %p209
    %p211 = scmp.ne.s32.totalorder %s199, %s200
    %p212 = scmp.eq.s32.totalorder %s24, 1
    %p213 = por %p211, %p212
    %p215 = scmp.ne.s32.totalorder %s200, %s214
    %p216 = scmp.eq.s32.totalorder %s24, 0
    %p217 = por %p215, %p216
    %s219 = sadd.s32 %s218, 1
    %p222 = scmp.eq.s32.totalorder %s18, 1
    %p223 = scmp.ne.s32.totalorder %s218, %s220
    %p224 = scmp.eq.s32.totalorder %s18, 0
    %p225 = por %p223, %p224
    %p226 = scmp.ne.s32.totalorder %s218, %s220
    %p227 = scmp.eq.s32.totalorder %s23, 1
    %p228 = por %p226, %p227
    %p229 = scmp.ne.s32.totalorder %s220, %s221
    %p230 = scmp.eq.s32.totalorder %s23, 0
    %p231 = por %p229, %p230
    %p232 = scmp.ne.s32.totalorder %s220, %s221
    %p233 = scmp.eq.s32.totalorder %s24, 1
    %p234 = por %p232, %p233
    %p236 = scmp.ne.s32.totalorder %s221, %s235
    %p237 = scmp.eq.s32.totalorder %s24, 0
    %p238 = por %p236, %p237
    %s240 = sadd.s32 %s239, 1
    %p243 = scmp.eq.s32.totalorder %s18, 1
    %p244 = scmp.ne.s32.totalorder %s239, %s241
    %p245 = scmp.eq.s32.totalorder %s18, 0
    %p246 = por %p244, %p245
    %p247 = scmp.ne.s32.totalorder %s239, %s241
    %p248 = scmp.eq.s32.totalorder %s23, 1
    %p249 = por %p247, %p248
    %p250 = scmp.ne.s32.totalorder %s241, %s242
    %p251 = scmp.eq.s32.totalorder %s23, 0
    %p252 = por %p250, %p251
    %p253 = scmp.ne.s32.totalorder %s241, %s242
    %p254 = scmp.eq.s32.totalorder %s24, 1
    %p255 = por %p253, %p254
    %p257 = scmp.ne.s32.totalorder %s242, %s256
    %p258 = scmp.eq.s32.totalorder %s24, 0
    %p259 = por %p257, %p258
    %s261 = sadd.s32 %s260, 1
    %p264 = scmp.eq.s32.totalorder %s18, 1
    %p265 = scmp.ne.s32.totalorder %s260, %s262
    %p266 = scmp.eq.s32.totalorder %s18, 0
    %p267 = por %p265, %p266
    %p268 = scmp.ne.s32.totalorder %s260, %s262
    %p269 = scmp.eq.s32.totalorder %s23, 1
    %p270 = por %p268, %p269
    %p271 = scmp.ne.s32.totalorder %s262, %s263
    %p272 = scmp.eq.s32.totalorder %s23, 0
    %p273 = por %p271, %p272
    %p274 = scmp.ne.s32.totalorder %s262, %s263
    %p275 = scmp.eq.s32.totalorder %s24, 1
    %p276 = por %p274, %p275
    %p278 = scmp.ne.s32.totalorder %s263, %s277
    %p279 = scmp.eq.s32.totalorder %s24, 0
    %p280 = por %p278, %p279
    %s282 = sadd.s32 %s281, 1
    %p285 = scmp.eq.s32.totalorder %s18, 1
    %p286 = scmp.ne.s32.totalorder %s281, %s283
    %p287 = scmp.eq.s32.totalorder %s18, 0
    %p288 = por %p286, %p287
    %p289 = scmp.ne.s32.totalorder %s281, %s283
    %p290 = scmp.eq.s32.totalorder %s23, 1
    %p291 = por %p289, %p290
    %p292 = scmp.ne.s32.totalorder %s283, %s284
    %p293 = scmp.eq.s32.totalorder %s23, 0
    %p294 = por %p292, %p293
    %p295 = scmp.ne.s32.totalorder %s283, %s284
    %p296 = scmp.eq.s32.totalorder %s24, 1
    %p297 = por %p295, %p296
    %p299 = scmp.ne.s32.totalorder %s284, %s298
    %p300 = scmp.eq.s32.totalorder %s24, 0
    %p301 = por %p299, %p300
    %s302 = ssub.s32 %s25, %s37
    %s303 = ssub.s32 %s26, %s33
    %s304 = sor.u32 %s302, %s303
    %p305 = scmp.eq.s32.totalorder %s304, 0
    %s307 = sadd.s32 %s306, 1
    %s308 = scalar_select %p305, %s306, %s307
    %p311 = pneg %p305
    %p312 = scmp.eq.s32.totalorder %s18, 1
    %p313 = por %p311, %p312
    %p314 = scmp.ne.s32.totalorder %s306, %s309
    %p315 = scmp.eq.s32.totalorder %s18, 0
    %p316 = por %p314, %p315
    %p317 = scmp.ne.s32.totalorder %s306, %s309
    %p318 = scmp.eq.s32.totalorder %s23, 1
    %p319 = por %p317, %p318
    %p320 = scmp.ne.s32.totalorder %s309, %s310
    %p321 = scmp.eq.s32.totalorder %s23, 0
    %p322 = por %p320, %p321
    %p323 = scmp.ne.s32.totalorder %s309, %s310
    %p324 = scmp.eq.s32.totalorder %s24, 1
    %p325 = por %p323, %p324
    %p327 = scmp.ne.s32.totalorder %s310, %s326
    %p328 = scmp.eq.s32.totalorder %s24, 0
    %p329 = por %p327, %p328
    %p330 = scmp.le.s32.totalorder 1, %s18
    %p331 = scmp.lt.s32.totalorder %s18, 3
    %p332 = pnand %p330, %p331
    %p333 = pneg %p332
    // Predicated region
    $region9: #{tpu_custom_call.1} parent=5 // pred_check
      _
    $region10: #{tpu_custom_call.1} parent=5 // pred_check_branch
      %335 = sbr.rel (%p332) target = $region12
    $region11: #{tpu_custom_call.1} parent=5 // pred_region
      %s336 = ssub.s32 %s18, 1
      // Predicated region
      $region13: #{tpu_custom_call.1} parent=11 // pred_check
        %p337 = pneg %p105
      $region14: #{tpu_custom_call.1} parent=11 // pred_check_branch
        %339 = sbr.rel (%p337) target = $region16
      $region15: #{tpu_custom_call.1} parent=11 // pred_region
        _
      $region16: #{tpu_custom_call.1} parent=11 // pred_fallthru
        _
      // Predicated region
      $region17: #{tpu_custom_call.1} parent=11 // pred_check
        %p340 = pneg %p126
      $region18: #{tpu_custom_call.1} parent=11 // pred_check_branch
        %342 = sbr.rel (%p340) target = $region20
      $region19: #{tpu_custom_call.1} parent=11 // pred_region
        _
      $region20: #{tpu_custom_call.1} parent=11 // pred_fallthru
        _
      // Predicated region
      $region21: #{tpu_custom_call.1} parent=11 // pred_check
        %p343 = pneg %p147
      $region22: #{tpu_custom_call.1} parent=11 // pred_check_branch
        %345 = sbr.rel (%p343) target = $region24
      $region23: #{tpu_custom_call.1} parent=11 // pred_region
        _
      $region24: #{tpu_custom_call.1} parent=11 // pred_fallthru
        _
      // Predicated region
      $region25: #{tpu_custom_call.1} parent=11 // pred_check
        %p346 = pneg %p168
      $region26: #{tpu_custom_call.1} parent=11 // pred_check_branch
        %348 = sbr.rel (%p346) target = $region28
      $region27: #{tpu_custom_call.1} parent=11 // pred_region
        _
      $region28: #{tpu_custom_call.1} parent=11 // pred_fallthru
        _
      // Predicated region
      $region29: #{tpu_custom_call.1} parent=11 // pred_check
        %p349 = pneg %p189
      $region30: #{tpu_custom_call.1} parent=11 // pred_check_branch
        %351 = sbr.rel (%p349) target = $region32
      $region31: #{tpu_custom_call.1} parent=11 // pred_region
        _
      $region32: #{tpu_custom_call.1} parent=11 // pred_fallthru
        _
      // Predicated region
      $region33: #{tpu_custom_call.1} parent=11 // pred_check
        %p352 = pneg %p210
      $region34: #{tpu_custom_call.1} parent=11 // pred_check_branch
        %354 = sbr.rel (%p352) target = $region36
      $region35: #{tpu_custom_call.1} parent=11 // pred_region
        _
      $region36: #{tpu_custom_call.1} parent=11 // pred_fallthru
        _
      // Predicated region
      $region37: #{tpu_custom_call.1} parent=11 // pred_check
        %p355 = pneg %p231
      $region38: #{tpu_custom_call.1} parent=11 // pred_check_branch
        %357 = sbr.rel (%p355) target = $region40
      $region39: #{tpu_custom_call.1} parent=11 // pred_region
        _
      $region40: #{tpu_custom_call.1} parent=11 // pred_fallthru
        _
      // Predicated region
      $region41: #{tpu_custom_call.1} parent=11 // pred_check
        %p358 = pneg %p252
      $region42: #{tpu_custom_call.1} parent=11 // pred_check_branch
        %360 = sbr.rel (%p358) target = $region44
      $region43: #{tpu_custom_call.1} parent=11 // pred_region
        _
      $region44: #{tpu_custom_call.1} parent=11 // pred_fallthru
        _
      // Predicated region
      $region45: #{tpu_custom_call.1} parent=11 // pred_check
        %p361 = pneg %p273
      $region46: #{tpu_custom_call.1} parent=11 // pred_check_branch
        %363 = sbr.rel (%p361) target = $region48
      $region47: #{tpu_custom_call.1} parent=11 // pred_region
        _
      $region48: #{tpu_custom_call.1} parent=11 // pred_fallthru
        _
      // Predicated region
      $region49: #{tpu_custom_call.1} parent=11 // pred_check
        %p364 = pneg %p294
      $region50: #{tpu_custom_call.1} parent=11 // pred_check_branch
        %366 = sbr.rel (%p364) target = $region52
      $region51: #{tpu_custom_call.1} parent=11 // pred_region
        _
      $region52: #{tpu_custom_call.1} parent=11 // pred_fallthru
        _
    $region12: #{tpu_custom_call.1} parent=5 // pred_fallthru
      _
    %p367 = scmp.lt.s32.totalorder %s18, 2
    // Predicated region
    $region53: #{tpu_custom_call.1} parent=5 // pred_check
      %p368 = pneg %p367
    $region54: #{tpu_custom_call.1} parent=5 // pred_check_branch
      %370 = sbr.rel (%p368) target = $region56
    $region55: #{tpu_custom_call.1} parent=5 // pred_region
      // Predicated region
      $region57: #{tpu_custom_call.1} parent=55 // pred_check
        %p371 = pneg %p52
      $region58: #{tpu_custom_call.1} parent=55 // pred_check_branch
        %373 = sbr.rel (%p371) target = $region60
      $region59: #{tpu_custom_call.1} parent=55 // pred_region
        %p374 = scmp.lt.s32.totalorder %s25, 1
        %s375 = scalar_select %p374, %s25, 1
        %p376 = scmp.lt.s32.totalorder %s26, 0
        %s377 = scalar_select %p376, %s26, 0
        %s378 = smul.addr %s375, 16
        %s379 = sadd.s32 %s377, %s378
        %s380 = smul.addr %s379, 8
        %s381 = scalar_lea.vmem %s0, %s380
      $region60: #{tpu_custom_call.1} parent=55 // pred_fallthru
        _
      // Predicated region
      $region61: #{tpu_custom_call.1} parent=55 // pred_check
        %p382 = pneg %p78
      $region62: #{tpu_custom_call.1} parent=55 // pred_check_branch
        %384 = sbr.rel (%p382) target = $region64
      $region63: #{tpu_custom_call.1} parent=55 // pred_region
        %p385 = scmp.lt.s32.totalorder %s25, 1
        %s386 = scalar_select %p385, %s25, 1
        %s387 = smul.addr %s386, 48
        %s388 = smul.addr %s387, 8
        %s389 = scalar_lea.vmem %s1, %s388
      $region64: #{tpu_custom_call.1} parent=55 // pred_fallthru
        _
    $region56: #{tpu_custom_call.1} parent=5 // pred_fallthru
      _
    %p390 = scmp.le.s32.totalorder 1, %s18
    %p391 = scmp.lt.s32.totalorder %s18, 3
    %p392 = pnand %p390, %p391
    %p393 = pneg %p392
    // Predicated region
    $region65: #{tpu_custom_call.1} parent=5 // pred_check
      _
    $region66: #{tpu_custom_call.1} parent=5 // pred_check_branch
      %395 = sbr.rel (%p392) target = $region68
    $region67: #{tpu_custom_call.1} parent=5 // pred_region
      %s396 = ssub.s32 %s18, 1
      %p397 = scmp.lt.s32.totalorder %s27, 1
      %s398 = scalar_select %p397, %s27, 1
      %p399 = scmp.lt.s32.totalorder %s28, 0
      %s400 = scalar_select %p399, %s28, 0
      %s401 = smul.addr %s398, 16
      %s402 = sadd.s32 %s400, %s401
      %s403 = smul.addr %s402, 8
      %s404 = scalar_lea.vmem %s0, %s403
      %p405 = pneg %p58
      %p406 = pneg %p55
      %p407 = scmp.lt.s32.totalorder %s27, 1
      %s408 = scalar_select %p407, %s27, 1
      %s409 = smul.addr %s408, 48
      %s410 = smul.addr %s409, 8
      %s411 = scalar_lea.vmem %s1, %s410
      %p412 = pneg %p84
      %p413 = pneg %p81
      %p414 = pneg %p105
      %p415 = pneg %p102
      %p416 = pneg %p126
      %p417 = pneg %p123
      %p418 = pneg %p147
      %p419 = pneg %p144
      %p420 = pneg %p168
      %p421 = pneg %p165
      %p422 = pneg %p189
      %p423 = pneg %p186
      %p424 = pneg %p210
      %p425 = pneg %p207
      %p426 = pneg %p231
      %p427 = pneg %p228
      %p428 = pneg %p252
      %p429 = pneg %p249
      %p430 = pneg %p273
      %p431 = pneg %p270
      %p432 = pneg %p294
      %p433 = pneg %p291
      %p434 = pneg %p322
      %p435 = pneg %p319
      %p436 = scmp.lt.s32.totalorder %s27, 1
      %s437 = scalar_select %p436, %s27, 1
      %p438 = scmp.lt.s32.totalorder %s28, 0
      %s439 = scalar_select %p438, %s28, 0
      %s440 = sadd.s32 %s439, %s437
      %s441 = smul.addr %s440, 4
      %s442 = scalar_lea.vmem %s12, %s441
      %p443 = scmp.lt.s32.totalorder %s27, 1
      %s444 = scalar_select %p443, %s27, 1
      %p445 = scmp.lt.s32.totalorder %s28, 0
      %s446 = scalar_select %p445, %s28, 0
      %s447 = smul.addr %s444, 16
      %s448 = sadd.s32 %s446, %s447
      %s449 = smul.addr %s448, 8
      %s450 = scalar_lea.vmem %s0, %s449
      %p451 = scmp.lt.s32.totalorder %s27, 1
      %s452 = scalar_select %p451, %s27, 1
      %s453 = smul.addr %s452, 48
      %s454 = smul.addr %s453, 8
      %s455 = scalar_lea.vmem %s1, %s454
      %p456 = scmp.lt.s32.totalorder %s27, 1
      %s457 = scalar_select %p456, %s27, 1
      %p458 = scmp.lt.s32.totalorder %s28, 0
      %s459 = scalar_select %p458, %s28, 0
      %s460 = sadd.s32 %s459, %s457
      %s461 = smul.addr %s460, 4
      %s462 = scalar_lea.vmem %s12, %s461
      %v463 = vld [vmem:[%s450] sm:$0xff]
      %v464 = vld [vmem:[%s450 + $0x8] sm:$0xff]
      %v465 = vld [vmem:[%s450 + $0x10] sm:$0xff]
      %v466 = vld [vmem:[%s450 + $0x18] sm:$0xff]
      %v467 = vld [vmem:[%s450 + $0x20] sm:$0xff]
      %v468 = vld [vmem:[%s450 + $0x28] sm:$0xff]
      %v469 = vld [vmem:[%s450 + $0x30] sm:$0xff]
      %v470 = vld [vmem:[%s450 + $0x38] sm:$0xff]
      %v471 = vld [vmem:[%s450 + $0x40] sm:$0xff]
      %v472 = vld [vmem:[%s450 + $0x48] sm:$0xff]
      %v473 = vld [vmem:[%s450 + $0x50] sm:$0xff]
      %v474 = vld [vmem:[%s450 + $0x58] sm:$0xff]
      %v475 = vld [vmem:[%s450 + $0x60] sm:$0xff]
      %v476 = vld [vmem:[%s450 + $0x68] sm:$0xff]
      %v477 = vld [vmem:[%s450 + $0x70] sm:$0xff]
      %v478 = vld [vmem:[%s450 + $0x78] sm:$0xff]
      %v479 = vld [vmem:[%s455] sm:$0xff]
      %v480 = vld [vmem:[%s455 + $0x8] sm:$0xff]
      %v481 = vld [vmem:[%s455 + $0x10] sm:$0xff]
      %v482 = vld [vmem:[%s455 + $0x18] sm:$0xff]
      %v483 = vld [vmem:[%s455 + $0x20] sm:$0xff]
      %v484 = vld [vmem:[%s455 + $0x28] sm:$0xff]
      %v485 = vld [vmem:[%s455 + $0x30] sm:$0xff]
      %v486 = vld [vmem:[%s455 + $0x38] sm:$0xff]
      %v487 = vld [vmem:[%s455 + $0x40] sm:$0xff]
      %v488 = vld [vmem:[%s455 + $0x48] sm:$0xff]
      %v489 = vld [vmem:[%s455 + $0x50] sm:$0xff]
      %v490 = vld [vmem:[%s455 + $0x58] sm:$0xff]
      %v491 = vld [vmem:[%s455 + $0x60] sm:$0xff]
      %v492 = vld [vmem:[%s455 + $0x68] sm:$0xff]
      %v493 = vld [vmem:[%s455 + $0x70] sm:$0xff]
      %v494 = vld [vmem:[%s455 + $0x78] sm:$0xff]
      %v495 = vld [vmem:[%s455 + $0x80] sm:$0xff]
      %v496 = vld [vmem:[%s455 + $0x88] sm:$0xff]
      %v497 = vld [vmem:[%s455 + $0x90] sm:$0xff]
      %v498 = vld [vmem:[%s455 + $0x98] sm:$0xff]
      %v499 = vld [vmem:[%s455 + $0xa0] sm:$0xff]
      %v500 = vld [vmem:[%s455 + $0xa8] sm:$0xff]
      %v501 = vld [vmem:[%s455 + $0xb0] sm:$0xff]
      %v502 = vld [vmem:[%s455 + $0xb8] sm:$0xff]
      %v503 = vld [vmem:[%s455 + $0xc0] sm:$0xff]
      %v504 = vld [vmem:[%s455 + $0xc8] sm:$0xff]
      %v505 = vld [vmem:[%s455 + $0xd0] sm:$0xff]
      %v506 = vld [vmem:[%s455 + $0xd8] sm:$0xff]
      %v507 = vld [vmem:[%s455 + $0xe0] sm:$0xff]
      %v508 = vld [vmem:[%s455 + $0xe8] sm:$0xff]
      %v509 = vld [vmem:[%s455 + $0xf0] sm:$0xff]
      %v510 = vld [vmem:[%s455 + $0xf8] sm:$0xff]
      %v511 = vld [vmem:[%s455 + $0x100] sm:$0xff]
      %v512 = vld [vmem:[%s455 + $0x108] sm:$0xff]
      %v513 = vld [vmem:[%s455 + $0x110] sm:$0xff]
      %v514 = vld [vmem:[%s455 + $0x118] sm:$0xff]
      %v515 = vld [vmem:[%s455 + $0x120] sm:$0xff]
      %v516 = vld [vmem:[%s455 + $0x128] sm:$0xff]
      %v517 = vld [vmem:[%s455 + $0x130] sm:$0xff]
      %v518 = vld [vmem:[%s455 + $0x138] sm:$0xff]
      %v519 = vld [vmem:[%s455 + $0x140] sm:$0xff]
      %v520 = vld [vmem:[%s455 + $0x148] sm:$0xff]
      %v521 = vld [vmem:[%s455 + $0x150] sm:$0xff]
      %v522 = vld [vmem:[%s455 + $0x158] sm:$0xff]
      %v523 = vld [vmem:[%s455 + $0x160] sm:$0xff]
      %v524 = vld [vmem:[%s455 + $0x168] sm:$0xff]
      %v525 = vld [vmem:[%s455 + $0x170] sm:$0xff]
      %v526 = vld [vmem:[%s455 + $0x178] sm:$0xff]
      %v527 = vld [vmem:[%s2] sm:$0xff]
      %v528 = vld [vmem:[%s2 + $0x8] sm:$0xff]
      %v529 = vld [vmem:[%s2 + $0x10] sm:$0xff]
      %v530 = vld [vmem:[%s2 + $0x18] sm:$0xff]
      %v531 = vld [vmem:[%s2 + $0x20] sm:$0xff]
      %v532 = vld [vmem:[%s2 + $0x28] sm:$0xff]
      %v533 = vld [vmem:[%s2 + $0x30] sm:$0xff]
      %v534 = vld [vmem:[%s2 + $0x38] sm:$0xff]
      %v535 = vld [vmem:[%s2 + $0x40] sm:$0xff]
      %v536 = vld [vmem:[%s2 + $0x48] sm:$0xff]
      %v537 = vld [vmem:[%s2 + $0x50] sm:$0xff]
      %v538 = vld [vmem:[%s2 + $0x58] sm:$0xff]
      %v539 = vld [vmem:[%s2 + $0x60] sm:$0xff]
      %v540 = vld [vmem:[%s2 + $0x68] sm:$0xff]
      %v541 = vld [vmem:[%s2 + $0x70] sm:$0xff]
      %v542 = vld [vmem:[%s2 + $0x78] sm:$0xff]
      %v543 = vld [vmem:[%s2 + $0x80] sm:$0xff]
      %v544 = vld [vmem:[%s2 + $0x88] sm:$0xff]
      %v545 = vld [vmem:[%s2 + $0x90] sm:$0xff]
      %v546 = vld [vmem:[%s2 + $0x98] sm:$0xff]
      %v547 = vld [vmem:[%s2 + $0xa0] sm:$0xff]
      %v548 = vld [vmem:[%s2 + $0xa8] sm:$0xff]
      %v549 = vld [vmem:[%s2 + $0xb0] sm:$0xff]
      %v550 = vld [vmem:[%s2 + $0xb8] sm:$0xff]
      %v551 = vld [vmem:[%s2 + $0xc0] sm:$0xff]
      %v552 = vld [vmem:[%s2 + $0xc8] sm:$0xff]
      %v553 = vld [vmem:[%s2 + $0xd0] sm:$0xff]
      %v554 = vld [vmem:[%s2 + $0xd8] sm:$0xff]
      %v555 = vld [vmem:[%s2 + $0xe0] sm:$0xff]
      %v556 = vld [vmem:[%s2 + $0xe8] sm:$0xff]
      %v557 = vld [vmem:[%s2 + $0xf0] sm:$0xff]
      %v558 = vld [vmem:[%s2 + $0xf8] sm:$0xff]
      %560 = vset.pattern.permute.xlu0 0
      %561 = vperm.xlu0 %560, %v479
      %v562 = vpop.permute.xlu0 %561
      %565 = vset.pattern.permute.xlu0 0
      %566 = vperm.xlu0 %565, %v480
      %v567 = vpop.permute.xlu0 %566
      %570 = vset.pattern.permute.xlu0 0
      %571 = vperm.xlu0 %570, %v481
      %v572 = vpop.permute.xlu0 %571
      %575 = vset.pattern.permute.xlu0 0
      %576 = vperm.xlu0 %575, %v482
      %v577 = vpop.permute.xlu0 %576
      %580 = vset.pattern.permute.xlu0 0
      %581 = vperm.xlu0 %580, %v483
      %v582 = vpop.permute.xlu0 %581
      %585 = vset.pattern.permute.xlu0 0
      %586 = vperm.xlu0 %585, %v484
      %v587 = vpop.permute.xlu0 %586
      %590 = vset.pattern.permute.xlu0 0
      %591 = vperm.xlu0 %590, %v485
      %v592 = vpop.permute.xlu0 %591
      %595 = vset.pattern.permute.xlu0 0
      %596 = vperm.xlu0 %595, %v486
      %v597 = vpop.permute.xlu0 %596
      %600 = vset.pattern.permute.xlu0 0
      %601 = vperm.xlu0 %600, %v487
      %v602 = vpop.permute.xlu0 %601
      %605 = vset.pattern.permute.xlu0 0
      %606 = vperm.xlu0 %605, %v488
      %v607 = vpop.permute.xlu0 %606
      %610 = vset.pattern.permute.xlu0 0
      %611 = vperm.xlu0 %610, %v489
      %v612 = vpop.permute.xlu0 %611
      %615 = vset.pattern.permute.xlu0 0
      %616 = vperm.xlu0 %615, %v490
      %v617 = vpop.permute.xlu0 %616
      %620 = vset.pattern.permute.xlu0 0
      %621 = vperm.xlu0 %620, %v491
      %v622 = vpop.permute.xlu0 %621
      %625 = vset.pattern.permute.xlu0 0
      %626 = vperm.xlu0 %625, %v492
      %v627 = vpop.permute.xlu0 %626
      %630 = vset.pattern.permute.xlu0 0
      %631 = vperm.xlu0 %630, %v493
      %v632 = vpop.permute.xlu0 %631
      %635 = vset.pattern.permute.xlu0 0
      %636 = vperm.xlu0 %635, %v494
      %v637 = vpop.permute.xlu0 %636
      %640 = vset.pattern.permute.xlu0 0
      %641 = vperm.xlu0 %640, %v495
      %v642 = vpop.permute.xlu0 %641
      %645 = vset.pattern.permute.xlu0 0
      %646 = vperm.xlu0 %645, %v496
      %v647 = vpop.permute.xlu0 %646
      %650 = vset.pattern.permute.xlu0 0
      %651 = vperm.xlu0 %650, %v497
      %v652 = vpop.permute.xlu0 %651
      %655 = vset.pattern.permute.xlu0 0
      %656 = vperm.xlu0 %655, %v498
      %v657 = vpop.permute.xlu0 %656
      %660 = vset.pattern.permute.xlu0 0
      %661 = vperm.xlu0 %660, %v499
      %v662 = vpop.permute.xlu0 %661
      %665 = vset.pattern.permute.xlu0 0
      %666 = vperm.xlu0 %665, %v500
      %v667 = vpop.permute.xlu0 %666
      %670 = vset.pattern.permute.xlu0 0
      %671 = vperm.xlu0 %670, %v501
      %v672 = vpop.permute.xlu0 %671
      %675 = vset.pattern.permute.xlu0 0
      %676 = vperm.xlu0 %675, %v502
      %v677 = vpop.permute.xlu0 %676
      %680 = vset.pattern.permute.xlu0 0
      %681 = vperm.xlu0 %680, %v503
      %v682 = vpop.permute.xlu0 %681
      %685 = vset.pattern.permute.xlu0 0
      %686 = vperm.xlu0 %685, %v504
      %v687 = vpop.permute.xlu0 %686
      %690 = vset.pattern.permute.xlu0 0
      %691 = vperm.xlu0 %690, %v505
      %v692 = vpop.permute.xlu0 %691
      %695 = vset.pattern.permute.xlu0 0
      %696 = vperm.xlu0 %695, %v506
      %v697 = vpop.permute.xlu0 %696
      %700 = vset.pattern.permute.xlu0 0
      %701 = vperm.xlu0 %700, %v507
      %v702 = vpop.permute.xlu0 %701
      %705 = vset.pattern.permute.xlu0 0
      %706 = vperm.xlu0 %705, %v508
      %v707 = vpop.permute.xlu0 %706
      %710 = vset.pattern.permute.xlu0 0
      %711 = vperm.xlu0 %710, %v509
      %v712 = vpop.permute.xlu0 %711
      %715 = vset.pattern.permute.xlu0 0
      %716 = vperm.xlu0 %715, %v510
      %v717 = vpop.permute.xlu0 %716
      %719 = vmatprep.subr.mxu0 0.0
      %720 = vmatpush1.msra.mxu0 %v463
      %721 = vmatprep.subr.mxu0 0.0
      %722 = vmatpush1.msra.mxu0 %v464
      %723 = vmatprep.subr.mxu0 0.0
      %724 = vmatpush1.msra.mxu0 %v465
      %725 = vmatprep.subr.mxu0 0.0
      %726 = vmatpush1.msra.mxu0 %v466
      %727 = vmatprep.subr.mxu0 0.0
      %728 = vmatpush1.msra.mxu0 %v467
      %729 = vmatprep.subr.mxu0 0.0
      %730 = vmatpush1.msra.mxu0 %v468
      %731 = vmatprep.subr.mxu0 0.0
      %732 = vmatpush1.msra.mxu0 %v469
      %733 = vmatprep.subr.mxu0 0.0
      %734 = vmatpush1.msra.mxu0 %v470
      %735 = vmatprep.subr.mxu0 0.0
      %736 = vmatpush1.msra.mxu0 %v471
      %737 = vmatprep.subr.mxu0 0.0
      %738 = vmatpush1.msra.mxu0 %v472
      %739 = vmatprep.subr.mxu0 0.0
      %740 = vmatpush1.msra.mxu0 %v473
      %741 = vmatprep.subr.mxu0 0.0
      %742 = vmatpush1.msra.mxu0 %v474
      %743 = vmatprep.subr.mxu0 0.0
      %744 = vmatpush1.msra.mxu0 %v475
      %745 = vmatprep.subr.mxu0 0.0
      %746 = vmatpush1.msra.mxu0 %v476
      %747 = vmatprep.subr.mxu0 0.0
      %748 = vmatpush1.msra.mxu0 %v477
      %749 = vmatprep.subr.mxu0 0.0
      %750 = vmatpush1.msra.mxu0 %v478
      %751 = vmatprep.subr.mxu0 0.0
      %752 = vmatpush1.msra.mxu0 0.0
      %753 = vmatprep.subr.mxu0 0.0
      %754 = vmatpush1.msra.mxu0 0.0
      %755 = vmatprep.subr.mxu0 0.0
      %756 = vmatpush1.msra.mxu0 0.0
      %757 = vmatprep.subr.mxu0 0.0
      %758 = vmatpush1.msra.mxu0 0.0
      %759 = vmatprep.subr.mxu0 0.0
      %760 = vmatpush1.msra.mxu0 0.0
      %761 = vmatprep.subr.mxu0 0.0
      %762 = vmatpush1.msra.mxu0 0.0
      %763 = vmatprep.subr.mxu0 0.0
      %764 = vmatpush1.msra.mxu0 0.0
      %765 = vmatprep.subr.mxu0 0.0
      %766 = vmatpush1.msra.mxu0 0.0
      %767 = vmatprep.subr.mxu0 0.0
      %768 = vmatpush1.msra.mxu0 0.0
      %769 = vmatprep.subr.mxu0 0.0
      %770 = vmatpush1.msra.mxu0 0.0
      %771 = vmatprep.subr.mxu0 0.0
      %772 = vmatpush1.msra.mxu0 0.0
      %773 = vmatprep.subr.mxu0 0.0
      %774 = vmatpush1.msra.mxu0 0.0
      %775 = vmatprep.subr.mxu0 0.0
      %776 = vmatpush1.msra.mxu0 0.0
      %777 = vmatprep.subr.mxu0 0.0
      %778 = vmatpush1.msra.mxu0 0.0
      %779 = vmatprep.subr.mxu0 0.0
      %780 = vmatpush1.msra.mxu0 0.0
      %781 = vmatprep.subr.mxu0 0.0
      %782 = vmatpush1.msra.mxu0 0.0
      %783 = vmatprep.mubr.f32.mxu0 0.0
      %784 = vmatmul.mubr.f32.gmra.mrb[0].mxu0 %v527
      %v785 = vpop.f32.mrb[0].mxu0
      %v786 = vadd.f32 %v562, %v785
      %v787 = vpop.f32.mrb[0].mxu0
      %788 = vmatprep.mubr.f32.mxu0 0.0
      %789 = vmatmul.mubr.f32.gmra.mrb[0].mxu0 %v528
      %v790 = vpop.f32.mrb[0].mxu0
      %v791 = vadd.f32 %v567, %v790
      %v792 = vpop.f32.mrb[0].mxu0
      %793 = vmatprep.mubr.f32.mxu0 0.0
      %794 = vmatmul.mubr.f32.gmra.mrb[0].mxu0 %v529
      %v795 = vpop.f32.mrb[0].mxu0
      %v796 = vadd.f32 %v572, %v795
      %v797 = vpop.f32.mrb[0].mxu0
      %798 = vmatprep.mubr.f32.mxu0 0.0
      %799 = vmatmul.mubr.f32.gmra.mrb[0].mxu0 %v530
      %v800 = vpop.f32.mrb[0].mxu0
      %v801 = vadd.f32 %v577, %v800
      %v802 = vpop.f32.mrb[0].mxu0
      %803 = vmatprep.mubr.f32.mxu0 0.0
      %804 = vmatmul.mubr.f32.gmra.mrb[0].mxu0 %v531
      %v805 = vpop.f32.mrb[0].mxu0
      %v806 = vadd.f32 %v582, %v805
      %v807 = vpop.f32.mrb[0].mxu0
      %808 = vmatprep.mubr.f32.mxu0 0.0
      %809 = vmatmul.mubr.f32.gmra.mrb[0].mxu0 %v532
      %v810 = vpop.f32.mrb[0].mxu0
      %v811 = vadd.f32 %v587, %v810
      %v812 = vpop.f32.mrb[0].mxu0
      %813 = vmatprep.mubr.f32.mxu0 0.0
      %814 = vmatmul.mubr.f32.gmra.mrb[0].mxu0 %v533
      %v815 = vpop.f32.mrb[0].mxu0
      %v816 = vadd.f32 %v592, %v815
      %v817 = vpop.f32.mrb[0].mxu0
      %818 = vmatprep.mubr.f32.mxu0 0.0
      %819 = vmatmul.mubr.f32.gmra.mrb[0].mxu0 %v534
      %v820 = vpop.f32.mrb[0].mxu0
      %v821 = vadd.f32 %v597, %v820
      %v822 = vpop.f32.mrb[0].mxu0
      %823 = vmatprep.mubr.f32.mxu0 0.0
      %824 = vmatmul.mubr.f32.gmra.mrb[0].mxu0 %v535
      %v825 = vpop.f32.mrb[0].mxu0
      %v826 = vadd.f32 %v602, %v825
      %v827 = vpop.f32.mrb[0].mxu0
      %828 = vmatprep.mubr.f32.mxu0 0.0
      %829 = vmatmul.mubr.f32.gmra.mrb[0].mxu0 %v536
      %v830 = vpop.f32.mrb[0].mxu0
      %v831 = vadd.f32 %v607, %v830
      %v832 = vpop.f32.mrb[0].mxu0
      %833 = vmatprep.mubr.f32.mxu0 0.0
      %834 = vmatmul.mubr.f32.gmra.mrb[0].mxu0 %v537
      %v835 = vpop.f32.mrb[0].mxu0
      %v836 = vadd.f32 %v612, %v835
      %v837 = vpop.f32.mrb[0].mxu0
      %838 = vmatprep.mubr.f32.mxu0 0.0
      %839 = vmatmul.mubr.f32.gmra.mrb[0].mxu0 %v538
      %v840 = vpop.f32.mrb[0].mxu0
      %v841 = vadd.f32 %v617, %v840
      %v842 = vpop.f32.mrb[0].mxu0
      %843 = vmatprep.mubr.f32.mxu0 0.0
      %844 = vmatmul.mubr.f32.gmra.mrb[0].mxu0 %v539
      %v845 = vpop.f32.mrb[0].mxu0
      %v846 = vadd.f32 %v622, %v845
      %v847 = vpop.f32.mrb[0].mxu0
      %848 = vmatprep.mubr.f32.mxu0 0.0
      %849 = vmatmul.mubr.f32.gmra.mrb[0].mxu0 %v540
      %v850 = vpop.f32.mrb[0].mxu0
      %v851 = vadd.f32 %v627, %v850
      %v852 = vpop.f32.mrb[0].mxu0
      %853 = vmatprep.mubr.f32.mxu0 0.0
      %854 = vmatmul.mubr.f32.gmra.mrb[0].mxu0 %v541
      %v855 = vpop.f32.mrb[0].mxu0
      %v856 = vadd.f32 %v632, %v855
      %v857 = vpop.f32.mrb[0].mxu0
      %858 = vmatprep.mubr.f32.mxu0 0.0
      %859 = vmatmul.mubr.f32.gmra.mrb[0].mxu0 %v542
      %v860 = vpop.f32.mrb[0].mxu0
      %v861 = vadd.f32 %v637, %v860
      %v862 = vpop.f32.mrb[0].mxu0
      %863 = vmatprep.mubr.f32.mxu0 0.0
      %864 = vmatmul.mubr.f32.gmra.mrb[0].mxu0 %v543
      %v865 = vpop.f32.mrb[0].mxu0
      %v866 = vadd.f32 %v642, %v865
      %v867 = vpop.f32.mrb[0].mxu0
      %868 = vmatprep.mubr.f32.mxu0 0.0
      %869 = vmatmul.mubr.f32.gmra.mrb[0].mxu0 %v544
      %v870 = vpop.f32.mrb[0].mxu0
      %v871 = vadd.f32 %v647, %v870
      %v872 = vpop.f32.mrb[0].mxu0
      %873 = vmatprep.mubr.f32.mxu0 0.0
      %874 = vmatmul.mubr.f32.gmra.mrb[0].mxu0 %v545
      %v875 = vpop.f32.mrb[0].mxu0
      %v876 = vadd.f32 %v652, %v875
      %v877 = vpop.f32.mrb[0].mxu0
      %878 = vmatprep.mubr.f32.mxu0 0.0
      %879 = vmatmul.mubr.f32.gmra.mrb[0].mxu0 %v546
      %v880 = vpop.f32.mrb[0].mxu0
      %v881 = vadd.f32 %v657, %v880
      %v882 = vpop.f32.mrb[0].mxu0
      %883 = vmatprep.mubr.f32.mxu0 0.0
      %884 = vmatmul.mubr.f32.gmra.mrb[0].mxu0 %v547
      %v885 = vpop.f32.mrb[0].mxu0
      %v886 = vadd.f32 %v662, %v885
      %v887 = vpop.f32.mrb[0].mxu0
      %888 = vmatprep.mubr.f32.mxu0 0.0
      %889 = vmatmul.mubr.f32.gmra.mrb[0].mxu0 %v548
      %v890 = vpop.f32.mrb[0].mxu0
      %v891 = vadd.f32 %v667, %v890
      %v892 = vpop.f32.mrb[0].mxu0
      %893 = vmatprep.mubr.f32.mxu0 0.0
      %894 = vmatmul.mubr.f32.gmra.mrb[0].mxu0 %v549
      %v895 = vpop.f32.mrb[0].mxu0
      %v896 = vadd.f32 %v672, %v895
      %v897 = vpop.f32.mrb[0].mxu0
      %898 = vmatprep.mubr.f32.mxu0 0.0
      %899 = vmatmul.mubr.f32.gmra.mrb[0].mxu0 %v550
      %v900 = vpop.f32.mrb[0].mxu0
      %v901 = vadd.f32 %v677, %v900
      %v902 = vpop.f32.mrb[0].mxu0
      %903 = vmatprep.mubr.f32.mxu0 0.0
      %904 = vmatmul.mubr.f32.gmra.mrb[0].mxu0 %v551
      %v905 = vpop.f32.mrb[0].mxu0
      %v906 = vadd.f32 %v682, %v905
      %v907 = vpop.f32.mrb[0].mxu0
      %908 = vmatprep.mubr.f32.mxu0 0.0
      %909 = vmatmul.mubr.f32.gmra.mrb[0].mxu0 %v552
      %v910 = vpop.f32.mrb[0].mxu0
      %v911 = vadd.f32 %v687, %v910
      %v912 = vpop.f32.mrb[0].mxu0
      %913 = vmatprep.mubr.f32.mxu0 0.0
      %914 = vmatmul.mubr.f32.gmra.mrb[0].mxu0 %v553
      %v915 = vpop.f32.mrb[0].mxu0
      %v916 = vadd.f32 %v692, %v915
      %v917 = vpop.f32.mrb[0].mxu0
      %918 = vmatprep.mubr.f32.mxu0 0.0
      %919 = vmatmul.mubr.f32.gmra.mrb[0].mxu0 %v554
      %v920 = vpop.f32.mrb[0].mxu0
      %v921 = vadd.f32 %v697, %v920
      %v922 = vpop.f32.mrb[0].mxu0
      %923 = vmatprep.mubr.f32.mxu0 0.0
      %924 = vmatmul.mubr.f32.gmra.mrb[0].mxu0 %v555
      %v925 = vpop.f32.mrb[0].mxu0
      %v926 = vadd.f32 %v702, %v925
      %v927 = vpop.f32.mrb[0].mxu0
      %928 = vmatprep.mubr.f32.mxu0 0.0
      %929 = vmatmul.mubr.f32.gmra.mrb[0].mxu0 %v556
      %v930 = vpop.f32.mrb[0].mxu0
      %v931 = vadd.f32 %v707, %v930
      %v932 = vpop.f32.mrb[0].mxu0
      %933 = vmatprep.mubr.f32.mxu0 0.0
      %934 = vmatmul.mubr.f32.gmra.mrb[0].mxu0 %v557
      %v935 = vpop.f32.mrb[0].mxu0
      %v936 = vadd.f32 %v712, %v935
      %v937 = vpop.f32.mrb[0].mxu0
      %938 = vmatprep.mubr.f32.mxu0 0.0
      %939 = vmatmul.mubr.f32.gmra.mrb[0].mxu0 %v558
      %v940 = vpop.f32.mrb[0].mxu0
      %v941 = vadd.f32 %v717, %v940
      %v942 = vpop.f32.mrb[0].mxu0
      %943 = vdwg.mxu0
      %v944 = vmax.f32 %v786, 0.0
      %v945 = vmax.f32 %v791, 0.0
      %v946 = vmax.f32 %v796, 0.0
      %v947 = vmax.f32 %v801, 0.0
      %v948 = vmax.f32 %v806, 0.0
      %v949 = vmax.f32 %v811, 0.0
      %v950 = vmax.f32 %v816, 0.0
      %v951 = vmax.f32 %v821, 0.0
      %v952 = vmax.f32 %v826, 0.0
      %v953 = vmax.f32 %v831, 0.0
      %v954 = vmax.f32 %v836, 0.0
      %v955 = vmax.f32 %v841, 0.0
      %v956 = vmax.f32 %v846, 0.0
      %v957 = vmax.f32 %v851, 0.0
      %v958 = vmax.f32 %v856, 0.0
      %v959 = vmax.f32 %v861, 0.0
      %v960 = vmax.f32 %v866, 0.0
      %v961 = vmax.f32 %v871, 0.0
      %v962 = vmax.f32 %v876, 0.0
      %v963 = vmax.f32 %v881, 0.0
      %v964 = vmax.f32 %v886, 0.0
      %v965 = vmax.f32 %v891, 0.0
      %v966 = vmax.f32 %v896, 0.0
      %v967 = vmax.f32 %v901, 0.0
      %v968 = vmax.f32 %v906, 0.0
      %v969 = vmax.f32 %v911, 0.0
      %v970 = vmax.f32 %v916, 0.0
      %v971 = vmax.f32 %v921, 0.0
      %v972 = vmax.f32 %v926, 0.0
      %v973 = vmax.f32 %v931, 0.0
      %v974 = vmax.f32 %v936, 0.0
      %v975 = vmax.f32 %v941, 0.0
      %v976 = vld [vmem:[%s3] sm:$0xff]
      %v977 = vld [vmem:[%s3 + $0x8] sm:$0xff]
      %v978 = vld [vmem:[%s3 + $0x10] sm:$0xff]
      %v979 = vld [vmem:[%s3 + $0x18] sm:$0xff]
      %v980 = vld [vmem:[%s3 + $0x20] sm:$0xff]
      %v981 = vld [vmem:[%s3 + $0x28] sm:$0xff]
      %v982 = vld [vmem:[%s3 + $0x30] sm:$0xff]
      %v983 = vld [vmem:[%s3 + $0x38] sm:$0xff]
      %v984 = vld [vmem:[%s3 + $0x40] sm:$0xff]
      %v985 = vld [vmem:[%s3 + $0x48] sm:$0xff]
      %v986 = vld [vmem:[%s3 + $0x50] sm:$0xff]
      %v987 = vld [vmem:[%s3 + $0x58] sm:$0xff]
      %v988 = vld [vmem:[%s3 + $0x60] sm:$0xff]
      %v989 = vld [vmem:[%s3 + $0x68] sm:$0xff]
      %v990 = vld [vmem:[%s3 + $0x70] sm:$0xff]
      %v991 = vld [vmem:[%s3 + $0x78] sm:$0xff]
      %v992 = vld [vmem:[%s3 + $0x80] sm:$0xff]
      %v993 = vld [vmem:[%s3 + $0x88] sm:$0xff]
      %v994 = vld [vmem:[%s3 + $0x90] sm:$0xff]
      %v995 = vld [vmem:[%s3 + $0x98] sm:$0xff]
      %v996 = vld [vmem:[%s3 + $0xa0] sm:$0xff]
      %v997 = vld [vmem:[%s3 + $0xa8] sm:$0xff]
      %v998 = vld [vmem:[%s3 + $0xb0] sm:$0xff]
      %v999 = vld [vmem:[%s3 + $0xb8] sm:$0xff]
      %v1000 = vld [vmem:[%s3 + $0xc0] sm:$0xff]
      %v1001 = vld [vmem:[%s3 + $0xc8] sm:$0xff]
      %v1002 = vld [vmem:[%s3 + $0xd0] sm:$0xff]
      %v1003 = vld [vmem:[%s3 + $0xd8] sm:$0xff]
      %v1004 = vld [vmem:[%s3 + $0xe0] sm:$0xff]
      %v1005 = vld [vmem:[%s3 + $0xe8] sm:$0xff]
      %v1006 = vld [vmem:[%s3 + $0xf0] sm:$0xff]
      %v1007 = vld [vmem:[%s3 + $0xf8] sm:$0xff]
      %v1008 = vld [vmem:[%s4] sm:$0xff]
      %v1009 = vld [vmem:[%s4 + $0x8] sm:$0xff]
      %v1010 = vld [vmem:[%s4 + $0x10] sm:$0xff]
      %v1011 = vld [vmem:[%s4 + $0x18] sm:$0xff]
      %v1012 = vld [vmem:[%s4 + $0x20] sm:$0xff]
      %v1013 = vld [vmem:[%s4 + $0x28] sm:$0xff]
      %v1014 = vld [vmem:[%s4 + $0x30] sm:$0xff]
      %v1015 = vld [vmem:[%s4 + $0x38] sm:$0xff]
      %v1016 = vld [vmem:[%s4 + $0x40] sm:$0xff]
      %v1017 = vld [vmem:[%s4 + $0x48] sm:$0xff]
      %v1018 = vld [vmem:[%s4 + $0x50] sm:$0xff]
      %v1019 = vld [vmem:[%s4 + $0x58] sm:$0xff]
      %v1020 = vld [vmem:[%s4 + $0x60] sm:$0xff]
      %v1021 = vld [vmem:[%s4 + $0x68] sm:$0xff]
      %v1022 = vld [vmem:[%s4 + $0x70] sm:$0xff]
      %v1023 = vld [vmem:[%s4 + $0x78] sm:$0xff]
      %1025 = vset.pattern.permute.xlu0 0
      %1026 = vperm.xlu0 %1025, %v1008
      %v1027 = vpop.permute.xlu0 %1026
      %1030 = vset.pattern.permute.xlu0 0
      %1031 = vperm.xlu0 %1030, %v1009
      %v1032 = vpop.permute.xlu0 %1031
      %1035 = vset.pattern.permute.xlu0 0
      %1036 = vperm.xlu0 %1035, %v1010
      %v1037 = vpop.permute.xlu0 %1036
      %1040 = vset.pattern.permute.xlu0 0
      %1041 = vperm.xlu0 %1040, %v1011
      %v1042 = vpop.permute.xlu0 %1041
      %1045 = vset.pattern.permute.xlu0 0
      %1046 = vperm.xlu0 %1045, %v1012
      %v1047 = vpop.permute.xlu0 %1046
      %1050 = vset.pattern.permute.xlu0 0
      %1051 = vperm.xlu0 %1050, %v1013
      %v1052 = vpop.permute.xlu0 %1051
      %1055 = vset.pattern.permute.xlu0 0
      %1056 = vperm.xlu0 %1055, %v1014
      %v1057 = vpop.permute.xlu0 %1056
      %1060 = vset.pattern.permute.xlu0 0
      %1061 = vperm.xlu0 %1060, %v1015
      %v1062 = vpop.permute.xlu0 %1061
      %1065 = vset.pattern.permute.xlu0 0
      %1066 = vperm.xlu0 %1065, %v1016
      %v1067 = vpop.permute.xlu0 %1066
      %1070 = vset.pattern.permute.xlu0 0
      %1071 = vperm.xlu0 %1070, %v1017
      %v1072 = vpop.permute.xlu0 %1071
      %1075 = vset.pattern.permute.xlu0 0
      %1076 = vperm.xlu0 %1075, %v1018
      %v1077 = vpop.permute.xlu0 %1076
      %1080 = vset.pattern.permute.xlu0 0
      %1081 = vperm.xlu0 %1080, %v1019
      %v1082 = vpop.permute.xlu0 %1081
      %1085 = vset.pattern.permute.xlu0 0
      %1086 = vperm.xlu0 %1085, %v1020
      %v1087 = vpop.permute.xlu0 %1086
      %1090 = vset.pattern.permute.xlu0 0
      %1091 = vperm.xlu0 %1090, %v1021
      %v1092 = vpop.permute.xlu0 %1091
      %1095 = vset.pattern.permute.xlu0 0
      %1096 = vperm.xlu0 %1095, %v1022
      %v1097 = vpop.permute.xlu0 %1096
      %1100 = vset.pattern.permute.xlu0 0
      %1101 = vperm.xlu0 %1100, %v1023
      %v1102 = vpop.permute.xlu0 %1101
      %1104 = vmatprep.subr.mxu0 0.0
      %1105 = vmatpush1.msra.mxu0 %v944
      %1106 = vmatprep.subr.mxu0 0.0
      %1107 = vmatpush1.msra.mxu0 %v945
      %1108 = vmatprep.subr.mxu0 0.0
      %1109 = vmatpush1.msra.mxu0 %v946
      %1110 = vmatprep.subr.mxu0 0.0
      %1111 = vmatpush1.msra.mxu0 %v947
      %1112 = vmatprep.subr.mxu0 0.0
      %1113 = vmatpush1.msra.mxu0 %v948
      %1114 = vmatprep.subr.mxu0 0.0
      %1115 = vmatpush1.msra.mxu0 %v949
      %1116 = vmatprep.subr.mxu0 0.0
      %1117 = vmatpush1.msra.mxu0 %v950
      %1118 = vmatprep.subr.mxu0 0.0
      %1119 = vmatpush1.msra.mxu0 %v951
      %1120 = vmatprep.subr.mxu0 0.0
      %1121 = vmatpush1.msra.mxu0 %v952
      %1122 = vmatprep.subr.mxu0 0.0
      %1123 = vmatpush1.msra.mxu0 %v953
      %1124 = vmatprep.subr.mxu0 0.0
      %1125 = vmatpush1.msra.mxu0 %v954
      %1126 = vmatprep.subr.mxu0 0.0
      %1127 = vmatpush1.msra.mxu0 %v955
      %1128 = vmatprep.subr.mxu0 0.0
      %1129 = vmatpush1.msra.mxu0 %v956
      %1130 = vmatprep.subr.mxu0 0.0
      %1131 = vmatpush1.msra.mxu0 %v957
      %1132 = vmatprep.subr.mxu0 0.0
      %1133 = vmatpush1.msra.mxu0 %v958
      %1134 = vmatprep.subr.mxu0 0.0
      %1135 = vmatpush1.msra.mxu0 %v959
      %1136 = vmatprep.subr.mxu0 0.0
      %1137 = vmatpush1.msra.mxu0 %v960
      %1138 = vmatprep.subr.mxu0 0.0
      %1139 = vmatpush1.msra.mxu0 %v961
      %1140 = vmatprep.subr.mxu0 0.0
      %1141 = vmatpush1.msra.mxu0 %v962
      %1142 = vmatprep.subr.mxu0 0.0
      %1143 = vmatpush1.msra.mxu0 %v963
      %1144 = vmatprep.subr.mxu0 0.0
      %1145 = vmatpush1.msra.mxu0 %v964
      %1146 = vmatprep.subr.mxu0 0.0
      %1147 = vmatpush1.msra.mxu0 %v965
      %1148 = vmatprep.subr.mxu0 0.0
      %1149 = vmatpush1.msra.mxu0 %v966
      %1150 = vmatprep.subr.mxu0 0.0
      %1151 = vmatpush1.msra.mxu0 %v967
      %1152 = vmatprep.subr.mxu0 0.0
      %1153 = vmatpush1.msra.mxu0 %v968
      %1154 = vmatprep.subr.mxu0 0.0
      %1155 = vmatpush1.msra.mxu0 %v969
      %1156 = vmatprep.subr.mxu0 0.0
      %1157 = vmatpush1.msra.mxu0 %v970
      %1158 = vmatprep.subr.mxu0 0.0
      %1159 = vmatpush1.msra.mxu0 %v971
      %1160 = vmatprep.subr.mxu0 0.0
      %1161 = vmatpush1.msra.mxu0 %v972
      %1162 = vmatprep.subr.mxu0 0.0
      %1163 = vmatpush1.msra.mxu0 %v973
      %1164 = vmatprep.subr.mxu0 0.0
      %1165 = vmatpush1.msra.mxu0 %v974
      %1166 = vmatprep.subr.mxu0 0.0
      %1167 = vmatpush1.msra.mxu0 %v975
      %1168 = vmatprep.mubr.f32.mxu0 %v977
      %1169 = vmatmul.mubr.f32.gmra.mrb[0].mxu0 %v976
      %v1170 = vpop.f32.mrb[0].mxu0
      %v1171 = vadd.f32 %v1027, %v1170
      %v1172 = vpop.f32.mrb[0].mxu0
      %1173 = vmatprep.mubr.f32.mxu0 %v979
      %1174 = vmatmul.mubr.f32.gmra.mrb[0].mxu0 %v978
      %v1175 = vpop.f32.mrb[0].mxu0
      %v1176 = vadd.f32 %v1032, %v1175
      %v1177 = vpop.f32.mrb[0].mxu0
      %1178 = vmatprep.mubr.f32.mxu0 %v981
      %1179 = vmatmul.mubr.f32.gmra.mrb[0].mxu0 %v980
      %v1180 = vpop.f32.mrb[0].mxu0
      %v1181 = vadd.f32 %v1037, %v1180
      %v1182 = vpop.f32.mrb[0].mxu0
      %1183 = vmatprep.mubr.f32.mxu0 %v983
      %1184 = vmatmul.mubr.f32.gmra.mrb[0].mxu0 %v982
      %v1185 = vpop.f32.mrb[0].mxu0
      %v1186 = vadd.f32 %v1042, %v1185
      %v1187 = vpop.f32.mrb[0].mxu0
      %1188 = vmatprep.mubr.f32.mxu0 %v985
      %1189 = vmatmul.mubr.f32.gmra.mrb[0].mxu0 %v984
      %v1190 = vpop.f32.mrb[0].mxu0
      %v1191 = vadd.f32 %v1047, %v1190
      %v1192 = vpop.f32.mrb[0].mxu0
      %1193 = vmatprep.mubr.f32.mxu0 %v987
      %1194 = vmatmul.mubr.f32.gmra.mrb[0].mxu0 %v986
      %v1195 = vpop.f32.mrb[0].mxu0
      %v1196 = vadd.f32 %v1052, %v1195
      %v1197 = vpop.f32.mrb[0].mxu0
      %1198 = vmatprep.mubr.f32.mxu0 %v989
      %1199 = vmatmul.mubr.f32.gmra.mrb[0].mxu0 %v988
      %v1200 = vpop.f32.mrb[0].mxu0
      %v1201 = vadd.f32 %v1057, %v1200
      %v1202 = vpop.f32.mrb[0].mxu0
      %1203 = vmatprep.mubr.f32.mxu0 %v991
      %1204 = vmatmul.mubr.f32.gmra.mrb[0].mxu0 %v990
      %v1205 = vpop.f32.mrb[0].mxu0
      %v1206 = vadd.f32 %v1062, %v1205
      %v1207 = vpop.f32.mrb[0].mxu0
      %1208 = vmatprep.mubr.f32.mxu0 %v993
      %1209 = vmatmul.mubr.f32.gmra.mrb[0].mxu0 %v992
      %v1210 = vpop.f32.mrb[0].mxu0
      %v1211 = vadd.f32 %v1067, %v1210
      %v1212 = vpop.f32.mrb[0].mxu0
      %1213 = vmatprep.mubr.f32.mxu0 %v995
      %1214 = vmatmul.mubr.f32.gmra.mrb[0].mxu0 %v994
      %v1215 = vpop.f32.mrb[0].mxu0
      %v1216 = vadd.f32 %v1072, %v1215
      %v1217 = vpop.f32.mrb[0].mxu0
      %1218 = vmatprep.mubr.f32.mxu0 %v997
      %1219 = vmatmul.mubr.f32.gmra.mrb[0].mxu0 %v996
      %v1220 = vpop.f32.mrb[0].mxu0
      %v1221 = vadd.f32 %v1077, %v1220
      %v1222 = vpop.f32.mrb[0].mxu0
      %1223 = vmatprep.mubr.f32.mxu0 %v999
      %1224 = vmatmul.mubr.f32.gmra.mrb[0].mxu0 %v998
      %v1225 = vpop.f32.mrb[0].mxu0
      %v1226 = vadd.f32 %v1082, %v1225
      %v1227 = vpop.f32.mrb[0].mxu0
      %1228 = vmatprep.mubr.f32.mxu0 %v1001
      %1229 = vmatmul.mubr.f32.gmra.mrb[0].mxu0 %v1000
      %v1230 = vpop.f32.mrb[0].mxu0
      %v1231 = vadd.f32 %v1087, %v1230
      %v1232 = vpop.f32.mrb[0].mxu0
      %1233 = vmatprep.mubr.f32.mxu0 %v1003
      %1234 = vmatmul.mubr.f32.gmra.mrb[0].mxu0 %v1002
      %v1235 = vpop.f32.mrb[0].mxu0
      %v1236 = vadd.f32 %v1092, %v1235
      %v1237 = vpop.f32.mrb[0].mxu0
      %1238 = vmatprep.mubr.f32.mxu0 %v1005
      %1239 = vmatmul.mubr.f32.gmra.mrb[0].mxu0 %v1004
      %v1240 = vpop.f32.mrb[0].mxu0
      %v1241 = vadd.f32 %v1097, %v1240
      %v1242 = vpop.f32.mrb[0].mxu0
      %1243 = vmatprep.mubr.f32.mxu0 %v1007
      %1244 = vmatmul.mubr.f32.gmra.mrb[0].mxu0 %v1006
      %v1245 = vpop.f32.mrb[0].mxu0
      %v1246 = vadd.f32 %v1102, %v1245
      %v1247 = vpop.f32.mrb[0].mxu0
      %1248 = vdwg.mxu0
      %v1249 = vld [vmem:[%s5] sm:$0xff]
      %v1250 = vld [vmem:[%s5 + $0x8] sm:$0xff]
      %v1251 = vld [vmem:[%s5 + $0x10] sm:$0xff]
      %v1252 = vld [vmem:[%s5 + $0x18] sm:$0xff]
      %v1253 = vld [vmem:[%s5 + $0x20] sm:$0xff]
      %v1254 = vld [vmem:[%s5 + $0x28] sm:$0xff]
      %v1255 = vld [vmem:[%s5 + $0x30] sm:$0xff]
      %v1256 = vld [vmem:[%s5 + $0x38] sm:$0xff]
      %v1257 = vld [vmem:[%s5 + $0x40] sm:$0xff]
      %v1258 = vld [vmem:[%s5 + $0x48] sm:$0xff]
      %v1259 = vld [vmem:[%s5 + $0x50] sm:$0xff]
      %v1260 = vld [vmem:[%s5 + $0x58] sm:$0xff]
      %v1261 = vld [vmem:[%s5 + $0x60] sm:$0xff]
      %v1262 = vld [vmem:[%s5 + $0x68] sm:$0xff]
      %v1263 = vld [vmem:[%s5 + $0x70] sm:$0xff]
      %v1264 = vld [vmem:[%s5 + $0x78] sm:$0xff]
      %1266 = vset.pattern.permute.xlu0 0
      %1267 = vperm.xlu0 %1266, %v511
      %v1268 = vpop.permute.xlu0 %1267
      %1271 = vset.pattern.permute.xlu0 0
      %1272 = vperm.xlu0 %1271, %v512
      %v1273 = vpop.permute.xlu0 %1272
      %1276 = vset.pattern.permute.xlu0 0
      %1277 = vperm.xlu0 %1276, %v513
      %v1278 = vpop.permute.xlu0 %1277
      %1281 = vset.pattern.permute.xlu0 0
      %1282 = vperm.xlu0 %1281, %v514
      %v1283 = vpop.permute.xlu0 %1282
      %1286 = vset.pattern.permute.xlu0 0
      %1287 = vperm.xlu0 %1286, %v515
      %v1288 = vpop.permute.xlu0 %1287
      %1291 = vset.pattern.permute.xlu0 0
      %1292 = vperm.xlu0 %1291, %v516
      %v1293 = vpop.permute.xlu0 %1292
      %1296 = vset.pattern.permute.xlu0 0
      %1297 = vperm.xlu0 %1296, %v517
      %v1298 = vpop.permute.xlu0 %1297
      %1301 = vset.pattern.permute.xlu0 0
      %1302 = vperm.xlu0 %1301, %v518
      %v1303 = vpop.permute.xlu0 %1302
      %1306 = vset.pattern.permute.xlu0 0
      %1307 = vperm.xlu0 %1306, %v519
      %v1308 = vpop.permute.xlu0 %1307
      %1311 = vset.pattern.permute.xlu0 0
      %1312 = vperm.xlu0 %1311, %v520
      %v1313 = vpop.permute.xlu0 %1312
      %1316 = vset.pattern.permute.xlu0 0
      %1317 = vperm.xlu0 %1316, %v521
      %v1318 = vpop.permute.xlu0 %1317
      %1321 = vset.pattern.permute.xlu0 0
      %1322 = vperm.xlu0 %1321, %v522
      %v1323 = vpop.permute.xlu0 %1322
      %1326 = vset.pattern.permute.xlu0 0
      %1327 = vperm.xlu0 %1326, %v523
      %v1328 = vpop.permute.xlu0 %1327
      %1331 = vset.pattern.permute.xlu0 0
      %1332 = vperm.xlu0 %1331, %v524
      %v1333 = vpop.permute.xlu0 %1332
      %1336 = vset.pattern.permute.xlu0 0
      %1337 = vperm.xlu0 %1336, %v525
      %v1338 = vpop.permute.xlu0 %1337
      %1341 = vset.pattern.permute.xlu0 0
      %1342 = vperm.xlu0 %1341, %v526
      %v1343 = vpop.permute.xlu0 %1342
      %1345 = vmatprep.subr.mxu0 0.0
      %1346 = vmatpush1.msra.mxu0 %v1171
      %1347 = vmatprep.subr.mxu0 0.0
      %1348 = vmatpush1.msra.mxu0 %v1176
      %1349 = vmatprep.subr.mxu0 0.0
      %1350 = vmatpush1.msra.mxu0 %v1181
      %1351 = vmatprep.subr.mxu0 0.0
      %1352 = vmatpush1.msra.mxu0 %v1186
      %1353 = vmatprep.subr.mxu0 0.0
      %1354 = vmatpush1.msra.mxu0 %v1191
      %1355 = vmatprep.subr.mxu0 0.0
      %1356 = vmatpush1.msra.mxu0 %v1196
      %1357 = vmatprep.subr.mxu0 0.0
      %1358 = vmatpush1.msra.mxu0 %v1201
      %1359 = vmatprep.subr.mxu0 0.0
      %1360 = vmatpush1.msra.mxu0 %v1206
      %1361 = vmatprep.subr.mxu0 0.0
      %1362 = vmatpush1.msra.mxu0 %v1211
      %1363 = vmatprep.subr.mxu0 0.0
      %1364 = vmatpush1.msra.mxu0 %v1216
      %1365 = vmatprep.subr.mxu0 0.0
      %1366 = vmatpush1.msra.mxu0 %v1221
      %1367 = vmatprep.subr.mxu0 0.0
      %1368 = vmatpush1.msra.mxu0 %v1226
      %1369 = vmatprep.subr.mxu0 0.0
      %1370 = vmatpush1.msra.mxu0 %v1231
      %1371 = vmatprep.subr.mxu0 0.0
      %1372 = vmatpush1.msra.mxu0 %v1236
      %1373 = vmatprep.subr.mxu0 0.0
      %1374 = vmatpush1.msra.mxu0 %v1241
      %1375 = vmatprep.subr.mxu0 0.0
      %1376 = vmatpush1.msra.mxu0 %v1246
      %1377 = vmatprep.subr.mxu0 0.0
      %1378 = vmatpush1.msra.mxu0 0.0
      %1379 = vmatprep.subr.mxu0 0.0
      %1380 = vmatpush1.msra.mxu0 0.0
      %1381 = vmatprep.subr.mxu0 0.0
      %1382 = vmatpush1.msra.mxu0 0.0
      %1383 = vmatprep.subr.mxu0 0.0
      %1384 = vmatpush1.msra.mxu0 0.0
      %1385 = vmatprep.subr.mxu0 0.0
      %1386 = vmatpush1.msra.mxu0 0.0
      %1387 = vmatprep.subr.mxu0 0.0
      %1388 = vmatpush1.msra.mxu0 0.0
      %1389 = vmatprep.subr.mxu0 0.0
      %1390 = vmatpush1.msra.mxu0 0.0
      %1391 = vmatprep.subr.mxu0 0.0
      %1392 = vmatpush1.msra.mxu0 0.0
      %1393 = vmatprep.subr.mxu0 0.0
      %1394 = vmatpush1.msra.mxu0 0.0
      %1395 = vmatprep.subr.mxu0 0.0
      %1396 = vmatpush1.msra.mxu0 0.0
      %1397 = vmatprep.subr.mxu0 0.0
      %1398 = vmatpush1.msra.mxu0 0.0
      %1399 = vmatprep.subr.mxu0 0.0
      %1400 = vmatpush1.msra.mxu0 0.0
      %1401 = vmatprep.subr.mxu0 0.0
      %1402 = vmatpush1.msra.mxu0 0.0
      %1403 = vmatprep.subr.mxu0 0.0
      %1404 = vmatpush1.msra.mxu0 0.0
      %1405 = vmatprep.subr.mxu0 0.0
      %1406 = vmatpush1.msra.mxu0 0.0
      %1407 = vmatprep.subr.mxu0 0.0
      %1408 = vmatpush1.msra.mxu0 0.0
      %1409 = vmatprep.mubr.f32.mxu0 0.0
      %1410 = vmatmul.mubr.f32.gmra.mrb[0].mxu0 %v1249
      %v1411 = vpop.f32.mrb[0].mxu0
      %v1412 = vadd.f32 %v1268, %v1411
      %v1413 = vpop.f32.mrb[0].mxu0
      %1414 = vmatprep.mubr.f32.mxu0 0.0
      %1415 = vmatmul.mubr.f32.gmra.mrb[0].mxu0 %v1250
      %v1416 = vpop.f32.mrb[0].mxu0
      %v1417 = vadd.f32 %v1273, %v1416
      %v1418 = vpop.f32.mrb[0].mxu0
      %1419 = vmatprep.mubr.f32.mxu0 0.0
      %1420 = vmatmul.mubr.f32.gmra.mrb[0].mxu0 %v1251
      %v1421 = vpop.f32.mrb[0].mxu0
      %v1422 = vadd.f32 %v1278, %v1421
      %v1423 = vpop.f32.mrb[0].mxu0
      %1424 = vmatprep.mubr.f32.mxu0 0.0
      %1425 = vmatmul.mubr.f32.gmra.mrb[0].mxu0 %v1252
      %v1426 = vpop.f32.mrb[0].mxu0
      %v1427 = vadd.f32 %v1283, %v1426
      %v1428 = vpop.f32.mrb[0].mxu0
      %1429 = vmatprep.mubr.f32.mxu0 0.0
      %1430 = vmatmul.mubr.f32.gmra.mrb[0].mxu0 %v1253
      %v1431 = vpop.f32.mrb[0].mxu0
      %v1432 = vadd.f32 %v1288, %v1431
      %v1433 = vpop.f32.mrb[0].mxu0
      %1434 = vmatprep.mubr.f32.mxu0 0.0
      %1435 = vmatmul.mubr.f32.gmra.mrb[0].mxu0 %v1254
      %v1436 = vpop.f32.mrb[0].mxu0
      %v1437 = vadd.f32 %v1293, %v1436
      %v1438 = vpop.f32.mrb[0].mxu0
      %1439 = vmatprep.mubr.f32.mxu0 0.0
      %1440 = vmatmul.mubr.f32.gmra.mrb[0].mxu0 %v1255
      %v1441 = vpop.f32.mrb[0].mxu0
      %v1442 = vadd.f32 %v1298, %v1441
      %v1443 = vpop.f32.mrb[0].mxu0
      %1444 = vmatprep.mubr.f32.mxu0 0.0
      %1445 = vmatmul.mubr.f32.gmra.mrb[0].mxu0 %v1256
      %v1446 = vpop.f32.mrb[0].mxu0
      %v1447 = vadd.f32 %v1303, %v1446
      %v1448 = vpop.f32.mrb[0].mxu0
      %1449 = vmatprep.mubr.f32.mxu0 0.0
      %1450 = vmatmul.mubr.f32.gmra.mrb[0].mxu0 %v1257
      %v1451 = vpop.f32.mrb[0].mxu0
      %v1452 = vadd.f32 %v1308, %v1451
      %v1453 = vpop.f32.mrb[0].mxu0
      %1454 = vmatprep.mubr.f32.mxu0 0.0
      %1455 = vmatmul.mubr.f32.gmra.mrb[0].mxu0 %v1258
      %v1456 = vpop.f32.mrb[0].mxu0
      %v1457 = vadd.f32 %v1313, %v1456
      %v1458 = vpop.f32.mrb[0].mxu0
      %1459 = vmatprep.mubr.f32.mxu0 0.0
      %1460 = vmatmul.mubr.f32.gmra.mrb[0].mxu0 %v1259
      %v1461 = vpop.f32.mrb[0].mxu0
      %v1462 = vadd.f32 %v1318, %v1461
      %v1463 = vpop.f32.mrb[0].mxu0
      %1464 = vmatprep.mubr.f32.mxu0 0.0
      %1465 = vmatmul.mubr.f32.gmra.mrb[0].mxu0 %v1260
      %v1466 = vpop.f32.mrb[0].mxu0
      %v1467 = vadd.f32 %v1323, %v1466
      %v1468 = vpop.f32.mrb[0].mxu0
      %1469 = vmatprep.mubr.f32.mxu0 0.0
      %1470 = vmatmul.mubr.f32.gmra.mrb[0].mxu0 %v1261
      %v1471 = vpop.f32.mrb[0].mxu0
      %v1472 = vadd.f32 %v1328, %v1471
      %v1473 = vpop.f32.mrb[0].mxu0
      %1474 = vmatprep.mubr.f32.mxu0 0.0
      %1475 = vmatmul.mubr.f32.gmra.mrb[0].mxu0 %v1262
      %v1476 = vpop.f32.mrb[0].mxu0
      %v1477 = vadd.f32 %v1333, %v1476
      %v1478 = vpop.f32.mrb[0].mxu0
      %1479 = vmatprep.mubr.f32.mxu0 0.0
      %1480 = vmatmul.mubr.f32.gmra.mrb[0].mxu0 %v1263
      %v1481 = vpop.f32.mrb[0].mxu0
      %v1482 = vadd.f32 %v1338, %v1481
      %v1483 = vpop.f32.mrb[0].mxu0
      %1484 = vmatprep.mubr.f32.mxu0 0.0
      %1485 = vmatmul.mubr.f32.gmra.mrb[0].mxu0 %v1264
      %v1486 = vpop.f32.mrb[0].mxu0
      %v1487 = vadd.f32 %v1343, %v1486
      %v1488 = vpop.f32.mrb[0].mxu0
      %1489 = vdwg.mxu0
      %v1490 = vmax.f32 %v1412, 0.0
      %v1491 = vmax.f32 %v1417, 0.0
      %v1492 = vmax.f32 %v1422, 0.0
      %v1493 = vmax.f32 %v1427, 0.0
      %v1494 = vmax.f32 %v1432, 0.0
      %v1495 = vmax.f32 %v1437, 0.0
      %v1496 = vmax.f32 %v1442, 0.0
      %v1497 = vmax.f32 %v1447, 0.0
      %v1498 = vmax.f32 %v1452, 0.0
      %v1499 = vmax.f32 %v1457, 0.0
      %v1500 = vmax.f32 %v1462, 0.0
      %v1501 = vmax.f32 %v1467, 0.0
      %v1502 = vmax.f32 %v1472, 0.0
      %v1503 = vmax.f32 %v1477, 0.0
      %v1504 = vmax.f32 %v1482, 0.0
      %v1505 = vmax.f32 %v1487, 0.0
      %v1506 = vld [vmem:[%s6] sm:$0xff]
      %v1507 = vld [vmem:[%s6 + $0x8] sm:$0xff]
      %v1508 = vld [vmem:[%s6 + $0x10] sm:$0xff]
      %v1509 = vld [vmem:[%s6 + $0x18] sm:$0xff]
      %v1510 = vld [vmem:[%s6 + $0x20] sm:$0xff]
      %v1511 = vld [vmem:[%s6 + $0x28] sm:$0xff]
      %v1512 = vld [vmem:[%s6 + $0x30] sm:$0xff]
      %v1513 = vld [vmem:[%s6 + $0x38] sm:$0xff]
      %v1514 = vld [vmem:[%s6 + $0x40] sm:$0xff]
      %v1515 = vld [vmem:[%s6 + $0x48] sm:$0xff]
      %v1516 = vld [vmem:[%s6 + $0x50] sm:$0xff]
      %v1517 = vld [vmem:[%s6 + $0x58] sm:$0xff]
      %v1518 = vld [vmem:[%s6 + $0x60] sm:$0xff]
      %v1519 = vld [vmem:[%s6 + $0x68] sm:$0xff]
      %v1520 = vld [vmem:[%s6 + $0x70] sm:$0xff]
      %v1521 = vld [vmem:[%s6 + $0x78] sm:$0xff]
      %v1522 = vld [vmem:[%s7] sm:$0xff]
      %v1523 = vld [vmem:[%s7 + $0x8] sm:$0xff]
      %v1524 = vld [vmem:[%s7 + $0x10] sm:$0xff]
      %v1525 = vld [vmem:[%s7 + $0x18] sm:$0xff]
      %v1526 = vld [vmem:[%s7 + $0x20] sm:$0xff]
      %v1527 = vld [vmem:[%s7 + $0x28] sm:$0xff]
      %v1528 = vld [vmem:[%s7 + $0x30] sm:$0xff]
      %v1529 = vld [vmem:[%s7 + $0x38] sm:$0xff]
      %v1530 = vld [vmem:[%s7 + $0x40] sm:$0xff]
      %v1531 = vld [vmem:[%s7 + $0x48] sm:$0xff]
      %v1532 = vld [vmem:[%s7 + $0x50] sm:$0xff]
      %v1533 = vld [vmem:[%s7 + $0x58] sm:$0xff]
      %v1534 = vld [vmem:[%s7 + $0x60] sm:$0xff]
      %v1535 = vld [vmem:[%s7 + $0x68] sm:$0xff]
      %v1536 = vld [vmem:[%s7 + $0x70] sm:$0xff]
      %v1537 = vld [vmem:[%s7 + $0x78] sm:$0xff]
      %1539 = vset.pattern.permute.xlu0 0
      %1540 = vperm.xlu0 %1539, %v1522
      %v1541 = vpop.permute.xlu0 %1540
      %1544 = vset.pattern.permute.xlu0 0
      %1545 = vperm.xlu0 %1544, %v1523
      %v1546 = vpop.permute.xlu0 %1545
      %1549 = vset.pattern.permute.xlu0 0
      %1550 = vperm.xlu0 %1549, %v1524
      %v1551 = vpop.permute.xlu0 %1550
      %1554 = vset.pattern.permute.xlu0 0
      %1555 = vperm.xlu0 %1554, %v1525
      %v1556 = vpop.permute.xlu0 %1555
      %1559 = vset.pattern.permute.xlu0 0
      %1560 = vperm.xlu0 %1559, %v1526
      %v1561 = vpop.permute.xlu0 %1560
      %1564 = vset.pattern.permute.xlu0 0
      %1565 = vperm.xlu0 %1564, %v1527
      %v1566 = vpop.permute.xlu0 %1565
      %1569 = vset.pattern.permute.xlu0 0
      %1570 = vperm.xlu0 %1569, %v1528
      %v1571 = vpop.permute.xlu0 %1570
      %1574 = vset.pattern.permute.xlu0 0
      %1575 = vperm.xlu0 %1574, %v1529
      %v1576 = vpop.permute.xlu0 %1575
      %1579 = vset.pattern.permute.xlu0 0
      %1580 = vperm.xlu0 %1579, %v1530
      %v1581 = vpop.permute.xlu0 %1580
      %1584 = vset.pattern.permute.xlu0 0
      %1585 = vperm.xlu0 %1584, %v1531
      %v1586 = vpop.permute.xlu0 %1585
      %1589 = vset.pattern.permute.xlu0 0
      %1590 = vperm.xlu0 %1589, %v1532
      %v1591 = vpop.permute.xlu0 %1590
      %1594 = vset.pattern.permute.xlu0 0
      %1595 = vperm.xlu0 %1594, %v1533
      %v1596 = vpop.permute.xlu0 %1595
      %1599 = vset.pattern.permute.xlu0 0
      %1600 = vperm.xlu0 %1599, %v1534
      %v1601 = vpop.permute.xlu0 %1600
      %1604 = vset.pattern.permute.xlu0 0
      %1605 = vperm.xlu0 %1604, %v1535
      %v1606 = vpop.permute.xlu0 %1605
      %1609 = vset.pattern.permute.xlu0 0
      %1610 = vperm.xlu0 %1609, %v1536
      %v1611 = vpop.permute.xlu0 %1610
      %1614 = vset.pattern.permute.xlu0 0
      %1615 = vperm.xlu0 %1614, %v1537
      %v1616 = vpop.permute.xlu0 %1615
      %1618 = vmatprep.subr.mxu0 0.0
      %1619 = vmatpush1.msra.mxu0 %v1490
      %1620 = vmatprep.subr.mxu0 0.0
      %1621 = vmatpush1.msra.mxu0 %v1491
      %1622 = vmatprep.subr.mxu0 0.0
      %1623 = vmatpush1.msra.mxu0 %v1492
      %1624 = vmatprep.subr.mxu0 0.0
      %1625 = vmatpush1.msra.mxu0 %v1493
      %1626 = vmatprep.subr.mxu0 0.0
      %1627 = vmatpush1.msra.mxu0 %v1494
      %1628 = vmatprep.subr.mxu0 0.0
      %1629 = vmatpush1.msra.mxu0 %v1495
      %1630 = vmatprep.subr.mxu0 0.0
      %1631 = vmatpush1.msra.mxu0 %v1496
      %1632 = vmatprep.subr.mxu0 0.0
      %1633 = vmatpush1.msra.mxu0 %v1497
      %1634 = vmatprep.subr.mxu0 0.0
      %1635 = vmatpush1.msra.mxu0 %v1498
      %1636 = vmatprep.subr.mxu0 0.0
      %1637 = vmatpush1.msra.mxu0 %v1499
      %1638 = vmatprep.subr.mxu0 0.0
      %1639 = vmatpush1.msra.mxu0 %v1500
      %1640 = vmatprep.subr.mxu0 0.0
      %1641 = vmatpush1.msra.mxu0 %v1501
      %1642 = vmatprep.subr.mxu0 0.0
      %1643 = vmatpush1.msra.mxu0 %v1502
      %1644 = vmatprep.subr.mxu0 0.0
      %1645 = vmatpush1.msra.mxu0 %v1503
      %1646 = vmatprep.subr.mxu0 0.0
      %1647 = vmatpush1.msra.mxu0 %v1504
      %1648 = vmatprep.subr.mxu0 0.0
      %1649 = vmatpush1.msra.mxu0 %v1505
      %1650 = vmatprep.subr.mxu0 0.0
      %1651 = vmatpush1.msra.mxu0 0.0
      %1652 = vmatprep.subr.mxu0 0.0
      %1653 = vmatpush1.msra.mxu0 0.0
      %1654 = vmatprep.subr.mxu0 0.0
      %1655 = vmatpush1.msra.mxu0 0.0
      %1656 = vmatprep.subr.mxu0 0.0
      %1657 = vmatpush1.msra.mxu0 0.0
      %1658 = vmatprep.subr.mxu0 0.0
      %1659 = vmatpush1.msra.mxu0 0.0
      %1660 = vmatprep.subr.mxu0 0.0
      %1661 = vmatpush1.msra.mxu0 0.0
      %1662 = vmatprep.subr.mxu0 0.0
      %1663 = vmatpush1.msra.mxu0 0.0
      %1664 = vmatprep.subr.mxu0 0.0
      %1665 = vmatpush1.msra.mxu0 0.0
      %1666 = vmatprep.subr.mxu0 0.0
      %1667 = vmatpush1.msra.mxu0 0.0
      %1668 = vmatprep.subr.mxu0 0.0
      %1669 = vmatpush1.msra.mxu0 0.0
      %1670 = vmatprep.subr.mxu0 0.0
      %1671 = vmatpush1.msra.mxu0 0.0
      %1672 = vmatprep.subr.mxu0 0.0
      %1673 = vmatpush1.msra.mxu0 0.0
      %1674 = vmatprep.subr.mxu0 0.0
      %1675 = vmatpush1.msra.mxu0 0.0
      %1676 = vmatprep.subr.mxu0 0.0
      %1677 = vmatpush1.msra.mxu0 0.0
      %1678 = vmatprep.subr.mxu0 0.0
      %1679 = vmatpush1.msra.mxu0 0.0
      %1680 = vmatprep.subr.mxu0 0.0
      %1681 = vmatpush1.msra.mxu0 0.0
      %1682 = vmatprep.mubr.f32.mxu0 0.0
      %1683 = vmatmul.mubr.f32.gmra.mrb[0].mxu0 %v1506
      %v1684 = vpop.f32.mrb[0].mxu0
      %v1685 = vadd.f32 %v1541, %v1684
      %v1686 = vpop.f32.mrb[0].mxu0
      %1687 = vmatprep.mubr.f32.mxu0 0.0
      %1688 = vmatmul.mubr.f32.gmra.mrb[0].mxu0 %v1507
      %v1689 = vpop.f32.mrb[0].mxu0
      %v1690 = vadd.f32 %v1546, %v1689
      %v1691 = vpop.f32.mrb[0].mxu0
      %1692 = vmatprep.mubr.f32.mxu0 0.0
      %1693 = vmatmul.mubr.f32.gmra.mrb[0].mxu0 %v1508
      %v1694 = vpop.f32.mrb[0].mxu0
      %v1695 = vadd.f32 %v1551, %v1694
      %v1696 = vpop.f32.mrb[0].mxu0
      %1697 = vmatprep.mubr.f32.mxu0 0.0
      %1698 = vmatmul.mubr.f32.gmra.mrb[0].mxu0 %v1509
      %v1699 = vpop.f32.mrb[0].mxu0
      %v1700 = vadd.f32 %v1556, %v1699
      %v1701 = vpop.f32.mrb[0].mxu0
      %1702 = vmatprep.mubr.f32.mxu0 0.0
      %1703 = vmatmul.mubr.f32.gmra.mrb[0].mxu0 %v1510
      %v1704 = vpop.f32.mrb[0].mxu0
      %v1705 = vadd.f32 %v1561, %v1704
      %v1706 = vpop.f32.mrb[0].mxu0
      %1707 = vmatprep.mubr.f32.mxu0 0.0
      %1708 = vmatmul.mubr.f32.gmra.mrb[0].mxu0 %v1511
      %v1709 = vpop.f32.mrb[0].mxu0
      %v1710 = vadd.f32 %v1566, %v1709
      %v1711 = vpop.f32.mrb[0].mxu0
      %1712 = vmatprep.mubr.f32.mxu0 0.0
      %1713 = vmatmul.mubr.f32.gmra.mrb[0].mxu0 %v1512
      %v1714 = vpop.f32.mrb[0].mxu0
      %v1715 = vadd.f32 %v1571, %v1714
      %v1716 = vpop.f32.mrb[0].mxu0
      %1717 = vmatprep.mubr.f32.mxu0 0.0
      %1718 = vmatmul.mubr.f32.gmra.mrb[0].mxu0 %v1513
      %v1719 = vpop.f32.mrb[0].mxu0
      %v1720 = vadd.f32 %v1576, %v1719
      %v1721 = vpop.f32.mrb[0].mxu0
      %1722 = vmatprep.mubr.f32.mxu0 0.0
      %1723 = vmatmul.mubr.f32.gmra.mrb[0].mxu0 %v1514
      %v1724 = vpop.f32.mrb[0].mxu0
      %v1725 = vadd.f32 %v1581, %v1724
      %v1726 = vpop.f32.mrb[0].mxu0
      %1727 = vmatprep.mubr.f32.mxu0 0.0
      %1728 = vmatmul.mubr.f32.gmra.mrb[0].mxu0 %v1515
      %v1729 = vpop.f32.mrb[0].mxu0
      %v1730 = vadd.f32 %v1586, %v1729
      %v1731 = vpop.f32.mrb[0].mxu0
      %1732 = vmatprep.mubr.f32.mxu0 0.0
      %1733 = vmatmul.mubr.f32.gmra.mrb[0].mxu0 %v1516
      %v1734 = vpop.f32.mrb[0].mxu0
      %v1735 = vadd.f32 %v1591, %v1734
      %v1736 = vpop.f32.mrb[0].mxu0
      %1737 = vmatprep.mubr.f32.mxu0 0.0
      %1738 = vmatmul.mubr.f32.gmra.mrb[0].mxu0 %v1517
      %v1739 = vpop.f32.mrb[0].mxu0
      %v1740 = vadd.f32 %v1596, %v1739
      %v1741 = vpop.f32.mrb[0].mxu0
      %1742 = vmatprep.mubr.f32.mxu0 0.0
      %1743 = vmatmul.mubr.f32.gmra.mrb[0].mxu0 %v1518
      %v1744 = vpop.f32.mrb[0].mxu0
      %v1745 = vadd.f32 %v1601, %v1744
      %v1746 = vpop.f32.mrb[0].mxu0
      %1747 = vmatprep.mubr.f32.mxu0 0.0
      %1748 = vmatmul.mubr.f32.gmra.mrb[0].mxu0 %v1519
      %v1749 = vpop.f32.mrb[0].mxu0
      %v1750 = vadd.f32 %v1606, %v1749
      %v1751 = vpop.f32.mrb[0].mxu0
      %1752 = vmatprep.mubr.f32.mxu0 0.0
      %1753 = vmatmul.mubr.f32.gmra.mrb[0].mxu0 %v1520
      %v1754 = vpop.f32.mrb[0].mxu0
      %v1755 = vadd.f32 %v1611, %v1754
      %v1756 = vpop.f32.mrb[0].mxu0
      %1757 = vmatprep.mubr.f32.mxu0 0.0
      %1758 = vmatmul.mubr.f32.gmra.mrb[0].mxu0 %v1521
      %v1759 = vpop.f32.mrb[0].mxu0
      %v1760 = vadd.f32 %v1616, %v1759
      %v1761 = vpop.f32.mrb[0].mxu0
      %1762 = vdwg.mxu0
      %v1763 = vld [vmem:[%s8] sm:$0xff]
      %v1764 = vld [vmem:[%s8 + $0x8] sm:$0xff]
      %v1765 = vld [vmem:[%s8 + $0x10] sm:$0xff]
      %v1766 = vld [vmem:[%s8 + $0x18] sm:$0xff]
      %v1767 = vld [vmem:[%s8 + $0x20] sm:$0xff]
      %v1768 = vld [vmem:[%s8 + $0x28] sm:$0xff]
      %v1769 = vld [vmem:[%s8 + $0x30] sm:$0xff]
      %v1770 = vld [vmem:[%s8 + $0x38] sm:$0xff]
      %v1771 = vld [vmem:[%s9] sm:$0xff]
      %v1772 = vld [vmem:[%s9 + $0x8] sm:$0xff]
      %v1773 = vld [vmem:[%s9 + $0x10] sm:$0xff]
      %v1774 = vld [vmem:[%s9 + $0x18] sm:$0xff]
      %v1775 = vld [vmem:[%s9 + $0x20] sm:$0xff]
      %v1776 = vld [vmem:[%s9 + $0x28] sm:$0xff]
      %v1777 = vld [vmem:[%s9 + $0x30] sm:$0xff]
      %v1778 = vld [vmem:[%s9 + $0x38] sm:$0xff]
      %1780 = vset.pattern.permute.xlu0 0
      %1781 = vperm.xlu0 %1780, %v1771
      %v1782 = vpop.permute.xlu0 %1781
      %1785 = vset.pattern.permute.xlu0 0
      %1786 = vperm.xlu0 %1785, %v1772
      %v1787 = vpop.permute.xlu0 %1786
      %1790 = vset.pattern.permute.xlu0 0
      %1791 = vperm.xlu0 %1790, %v1773
      %v1792 = vpop.permute.xlu0 %1791
      %1795 = vset.pattern.permute.xlu0 0
      %1796 = vperm.xlu0 %1795, %v1774
      %v1797 = vpop.permute.xlu0 %1796
      %1800 = vset.pattern.permute.xlu0 0
      %1801 = vperm.xlu0 %1800, %v1775
      %v1802 = vpop.permute.xlu0 %1801
      %1805 = vset.pattern.permute.xlu0 0
      %1806 = vperm.xlu0 %1805, %v1776
      %v1807 = vpop.permute.xlu0 %1806
      %1810 = vset.pattern.permute.xlu0 0
      %1811 = vperm.xlu0 %1810, %v1777
      %v1812 = vpop.permute.xlu0 %1811
      %1815 = vset.pattern.permute.xlu0 0
      %1816 = vperm.xlu0 %1815, %v1778
      %v1817 = vpop.permute.xlu0 %1816
      %1819 = vmatprep.subr.mxu0 0.0
      %1820 = vmatpush1.msra.mxu0 %v1685
      %1821 = vmatprep.subr.mxu0 0.0
      %1822 = vmatpush1.msra.mxu0 %v1690
      %1823 = vmatprep.subr.mxu0 0.0
      %1824 = vmatpush1.msra.mxu0 %v1695
      %1825 = vmatprep.subr.mxu0 0.0
      %1826 = vmatpush1.msra.mxu0 %v1700
      %1827 = vmatprep.subr.mxu0 0.0
      %1828 = vmatpush1.msra.mxu0 %v1705
      %1829 = vmatprep.subr.mxu0 0.0
      %1830 = vmatpush1.msra.mxu0 %v1710
      %1831 = vmatprep.subr.mxu0 0.0
      %1832 = vmatpush1.msra.mxu0 %v1715
      %1833 = vmatprep.subr.mxu0 0.0
      %1834 = vmatpush1.msra.mxu0 %v1720
      %1835 = vmatprep.subr.mxu0 0.0
      %1836 = vmatpush1.msra.mxu0 %v1725
      %1837 = vmatprep.subr.mxu0 0.0
      %1838 = vmatpush1.msra.mxu0 %v1730
      %1839 = vmatprep.subr.mxu0 0.0
      %1840 = vmatpush1.msra.mxu0 %v1735
      %1841 = vmatprep.subr.mxu0 0.0
      %1842 = vmatpush1.msra.mxu0 %v1740
      %1843 = vmatprep.subr.mxu0 0.0
      %1844 = vmatpush1.msra.mxu0 %v1745
      %1845 = vmatprep.subr.mxu0 0.0
      %1846 = vmatpush1.msra.mxu0 %v1750
      %1847 = vmatprep.subr.mxu0 0.0
      %1848 = vmatpush1.msra.mxu0 %v1755
      %1849 = vmatprep.subr.mxu0 0.0
      %1850 = vmatpush1.msra.mxu0 %v1760
      %1851 = vmatprep.subr.mxu0 0.0
      %1852 = vmatpush1.msra.mxu0 0.0
      %1853 = vmatprep.subr.mxu0 0.0
      %1854 = vmatpush1.msra.mxu0 0.0
      %1855 = vmatprep.subr.mxu0 0.0
      %1856 = vmatpush1.msra.mxu0 0.0
      %1857 = vmatprep.subr.mxu0 0.0
      %1858 = vmatpush1.msra.mxu0 0.0
      %1859 = vmatprep.subr.mxu0 0.0
      %1860 = vmatpush1.msra.mxu0 0.0
      %1861 = vmatprep.subr.mxu0 0.0
      %1862 = vmatpush1.msra.mxu0 0.0
      %1863 = vmatprep.subr.mxu0 0.0
      %1864 = vmatpush1.msra.mxu0 0.0
      %1865 = vmatprep.subr.mxu0 0.0
      %1866 = vmatpush1.msra.mxu0 0.0
      %1867 = vmatprep.subr.mxu0 0.0
      %1868 = vmatpush1.msra.mxu0 0.0
      %1869 = vmatprep.subr.mxu0 0.0
      %1870 = vmatpush1.msra.mxu0 0.0
      %1871 = vmatprep.subr.mxu0 0.0
      %1872 = vmatpush1.msra.mxu0 0.0
      %1873 = vmatprep.subr.mxu0 0.0
      %1874 = vmatpush1.msra.mxu0 0.0
      %1875 = vmatprep.subr.mxu0 0.0
      %1876 = vmatpush1.msra.mxu0 0.0
      %1877 = vmatprep.subr.mxu0 0.0
      %1878 = vmatpush1.msra.mxu0 0.0
      %1879 = vmatprep.subr.mxu0 0.0
      %1880 = vmatpush1.msra.mxu0 0.0
      %1881 = vmatprep.subr.mxu0 0.0
      %1882 = vmatpush1.msra.mxu0 0.0
      %1883 = vmatprep.mubr.f32.mxu0 0.0
      %1884 = vmatmul.mubr.f32.gmra.mrb[0].mxu0 %v1763
      %v1885 = vpop.f32.mrb[0].mxu0
      %v1886 = vadd.f32 %v1782, %v1885
      %v1887 = vpop.f32.mrb[0].mxu0
      %1888 = vmatprep.mubr.f32.mxu0 0.0
      %1889 = vmatmul.mubr.f32.gmra.mrb[0].mxu0 %v1764
      %v1890 = vpop.f32.mrb[0].mxu0
      %v1891 = vadd.f32 %v1787, %v1890
      %v1892 = vpop.f32.mrb[0].mxu0
      %1893 = vmatprep.mubr.f32.mxu0 0.0
      %1894 = vmatmul.mubr.f32.gmra.mrb[0].mxu0 %v1765
      %v1895 = vpop.f32.mrb[0].mxu0
      %v1896 = vadd.f32 %v1792, %v1895
      %v1897 = vpop.f32.mrb[0].mxu0
      %1898 = vmatprep.mubr.f32.mxu0 0.0
      %1899 = vmatmul.mubr.f32.gmra.mrb[0].mxu0 %v1766
      %v1900 = vpop.f32.mrb[0].mxu0
      %v1901 = vadd.f32 %v1797, %v1900
      %v1902 = vpop.f32.mrb[0].mxu0
      %1903 = vmatprep.mubr.f32.mxu0 0.0
      %1904 = vmatmul.mubr.f32.gmra.mrb[0].mxu0 %v1767
      %v1905 = vpop.f32.mrb[0].mxu0
      %v1906 = vadd.f32 %v1802, %v1905
      %v1907 = vpop.f32.mrb[0].mxu0
      %1908 = vmatprep.mubr.f32.mxu0 0.0
      %1909 = vmatmul.mubr.f32.gmra.mrb[0].mxu0 %v1768
      %v1910 = vpop.f32.mrb[0].mxu0
      %v1911 = vadd.f32 %v1807, %v1910
      %v1912 = vpop.f32.mrb[0].mxu0
      %1913 = vmatprep.mubr.f32.mxu0 0.0
      %1914 = vmatmul.mubr.f32.gmra.mrb[0].mxu0 %v1769
      %v1915 = vpop.f32.mrb[0].mxu0
      %v1916 = vadd.f32 %v1812, %v1915
      %v1917 = vpop.f32.mrb[0].mxu0
      %1918 = vmatprep.mubr.f32.mxu0 0.0
      %1919 = vmatmul.mubr.f32.gmra.mrb[0].mxu0 %v1770
      %v1920 = vpop.f32.mrb[0].mxu0
      %v1921 = vadd.f32 %v1817, %v1920
      %v1922 = vpop.f32.mrb[0].mxu0
      %1923 = vdwg.mxu0
      %v1924 = vmax.f32 %v1886, 0.0
      %v1925 = vmax.f32 %v1891, 0.0
      %v1926 = vmax.f32 %v1896, 0.0
      %v1927 = vmax.f32 %v1901, 0.0
      %v1928 = vmax.f32 %v1906, 0.0
      %v1929 = vmax.f32 %v1911, 0.0
      %v1930 = vmax.f32 %v1916, 0.0
      %v1931 = vmax.f32 %v1921, 0.0
      %v1932 = vld [vmem:[%s10] sm:$0x7]
      %v1933 = vld [vmem:[%s11] sm:$0x7]
      %1935 = vset.pattern.permute.xlu0 0
      %1936 = vperm.xlu0 %1935, %v1933
      %v1937 = vpop.permute.xlu0 %1936
      %vm1939 = vcmask 523264
      %v1941 = vsel %vm1939, %v1932, 0
      %1943 = vmatprep.subr.mxu0 0.0
      %1944 = vmatpush1.msra.mxu0 %v1924
      %1945 = vmatprep.subr.mxu0 0.0
      %1946 = vmatpush1.msra.mxu0 %v1925
      %1947 = vmatprep.subr.mxu0 0.0
      %1948 = vmatpush1.msra.mxu0 %v1926
      %1949 = vmatprep.subr.mxu0 0.0
      %1950 = vmatpush1.msra.mxu0 %v1927
      %1951 = vmatprep.subr.mxu0 0.0
      %1952 = vmatpush1.msra.mxu0 %v1928
      %1953 = vmatprep.subr.mxu0 0.0
      %1954 = vmatpush1.msra.mxu0 %v1929
      %1955 = vmatprep.subr.mxu0 0.0
      %1956 = vmatpush1.msra.mxu0 %v1930
      %1957 = vmatprep.subr.mxu0 0.0
      %1958 = vmatpush1.msra.mxu0 %v1931
      %1959 = vmatprep.subr.mxu0 0.0
      %1960 = vmatpush1.msra.mxu0 0.0
      %1961 = vmatprep.subr.mxu0 0.0
      %1962 = vmatpush1.msra.mxu0 0.0
      %1963 = vmatprep.subr.mxu0 0.0
      %1964 = vmatpush1.msra.mxu0 0.0
      %1965 = vmatprep.subr.mxu0 0.0
      %1966 = vmatpush1.msra.mxu0 0.0
      %1967 = vmatprep.subr.mxu0 0.0
      %1968 = vmatpush1.msra.mxu0 0.0
      %1969 = vmatprep.subr.mxu0 0.0
      %1970 = vmatpush1.msra.mxu0 0.0
      %1971 = vmatprep.subr.mxu0 0.0
      %1972 = vmatpush1.msra.mxu0 0.0
      %1973 = vmatprep.subr.mxu0 0.0
      %1974 = vmatpush1.msra.mxu0 0.0
      %1975 = vmatprep.subr.mxu0 0.0
      %1976 = vmatpush1.msra.mxu0 0.0
      %1977 = vmatprep.subr.mxu0 0.0
      %1978 = vmatpush1.msra.mxu0 0.0
      %1979 = vmatprep.subr.mxu0 0.0
      %1980 = vmatpush1.msra.mxu0 0.0
      %1981 = vmatprep.subr.mxu0 0.0
      %1982 = vmatpush1.msra.mxu0 0.0
      %1983 = vmatprep.subr.mxu0 0.0
      %1984 = vmatpush1.msra.mxu0 0.0
      %1985 = vmatprep.subr.mxu0 0.0
      %1986 = vmatpush1.msra.mxu0 0.0
      %1987 = vmatprep.subr.mxu0 0.0
      %1988 = vmatpush1.msra.mxu0 0.0
      %1989 = vmatprep.subr.mxu0 0.0
      %1990 = vmatpush1.msra.mxu0 0.0
      %1991 = vmatprep.subr.mxu0 0.0
      %1992 = vmatpush1.msra.mxu0 0.0
      %1993 = vmatprep.subr.mxu0 0.0
      %1994 = vmatpush1.msra.mxu0 0.0
      %1995 = vmatprep.subr.mxu0 0.0
      %1996 = vmatpush1.msra.mxu0 0.0
      %1997 = vmatprep.subr.mxu0 0.0
      %1998 = vmatpush1.msra.mxu0 0.0
      %1999 = vmatprep.subr.mxu0 0.0
      %2000 = vmatpush1.msra.mxu0 0.0
      %2001 = vmatprep.subr.mxu0 0.0
      %2002 = vmatpush1.msra.mxu0 0.0
      %2003 = vmatprep.subr.mxu0 0.0
      %2004 = vmatpush1.msra.mxu0 0.0
      %2005 = vmatprep.subr.mxu0 0.0
      %2006 = vmatpush1.msra.mxu0 0.0
      %2007 = vmatprep.mubr.f32.mxu0 0.0
      %2008 = vmatmul.mubr.f32.gmra.mrb[0].mxu0 %v1941
      %v2009 = vpop.f32.mrb[0].mxu0
      %v2010 = vadd.f32 %v1937, %v2009
      %v2011 = vpop.f32.mrb[0].mxu0
      %2012 = vdwg.mxu0
      %2013 = vst [vmem:[%s462] sm:$0x7] %v2010
      %p2014 = scmp.lt.s32.totalorder %s27, 1
      %s2015 = scalar_select %p2014, %s27, 1
      %p2016 = scmp.lt.s32.totalorder %s28, 0
      %s2017 = scalar_select %p2016, %s28, 0
      %s2018 = sadd.s32 %s2017, %s2015
      %s2019 = smul.addr %s2018, 4
      %s2020 = scalar_lea.vmem %s12, %s2019
      // Predicated region
      $region69: #{tpu_custom_call.1} parent=67 // pred_check
        %p2021 = pneg %p319
      $region70: #{tpu_custom_call.1} parent=67 // pred_check_branch
        %2023 = sbr.rel (%p2021) target = $region72
      $region71: #{tpu_custom_call.1} parent=67 // pred_region
        _
      $region72: #{tpu_custom_call.1} parent=67 // pred_fallthru
        _
    $region68: #{tpu_custom_call.1} parent=5 // pred_fallthru
      _
    %p2024 = scmp.le.s32.totalorder 2, %s18
    // Predicated region
    $region73: #{tpu_custom_call.1} parent=5 // pred_check
      %p2025 = pneg %p2024
    $region74: #{tpu_custom_call.1} parent=5 // pred_check_branch
      %2027 = sbr.rel (%p2025) target = $region76
    $region75: #{tpu_custom_call.1} parent=5 // pred_region
      %s2028 = ssub.s32 %s18, 2
      // Predicated region
      $region77: #{tpu_custom_call.1} parent=75 // pred_check
        %p2029 = pneg %p325
      $region78: #{tpu_custom_call.1} parent=75 // pred_check_branch
        %2031 = sbr.rel (%p2029) target = $region80
      $region79: #{tpu_custom_call.1} parent=75 // pred_region
        %p2032 = scmp.lt.s32.totalorder %s29, 1
        %s2033 = scalar_select %p2032, %s29, 1
        %p2034 = scmp.lt.s32.totalorder %s30, 0
        %s2035 = scalar_select %p2034, %s30, 0
        %s2036 = sadd.s32 %s2035, %s2033
        %s2037 = smul.addr %s2036, 4
        %s2038 = scalar_lea.vmem %s12, %s2037
      $region80: #{tpu_custom_call.1} parent=75 // pred_fallthru
        _
    $region76: #{tpu_custom_call.1} parent=5 // pred_fallthru
      _
  $region6: #{tpu_custom_call.1} parent=0 // loop_footer
    %s22 = sadd.s32 1, %s18
  $region7: #{tpu_custom_call.1} parent=0 // loop_footer_branch
    %17 = sbr.rel target = $region3
  $region8: #{tpu_custom_call.1} parent=0 // loop_exit
    _

</llo_original>
